<compile_context>
chip_gen: v7x
topology: tpu7x:2x2x1
jax: 0.10.0
libtpu: 0.0.40
codegen_flags: <defaults>
</compile_context>

<pallas_src>
import jax
import jax.numpy as jnp
from jax.experimental import pallas as pl
from jax.experimental.pallas import tpu as pltpu

_LANES = 128  # weight-slab lane width (full vreg lanes, lane-dense DMA)


def _round8(n):
    return -(-n // 8) * 8


# ----------------------------- parameter packing ----------------------------

def pack_params(params, hidden, ydim):
    """Pack all encoder/decoder weights+biases into one (R, 128) f32 slab.

    Every tensor starts on an 8-row (sublane-tile) boundary; offsets are
    Python-static so the kernel slices the slab ref at compile time.
    """
    enc, dec = params["enc"], params["dec"]
    entries = [
        ("w1x", enc["w1x"]), ("w1m", enc["w1m"]), ("b1", enc["b1"]),
        ("w2", enc["w2"]), ("b2", enc["b2"]), ("w3", enc["w3"]), ("b3", enc["b3"]),
        ("v1", dec["v1"]), ("c1", dec["c1"]), ("v2", dec["v2"]), ("c2", dec["c2"]),
        ("v3", dec["v3"]), ("c3", dec["c3"]),
    ]
    offs = {}
    row = 0
    for name, arr in entries:
        r, c = arr.shape
        assert c <= _LANES
        offs[name] = (row, r, c)
        row += _round8(r)
    total_rows = _round8(row)
    slab = jnp.zeros((total_rows, _LANES), jnp.float32)
    for name, arr in entries:
        r0, r, c = offs[name]
        slab = slab.at[r0:r0 + r, :c].set(arr.astype(jnp.float32))
    return {"wslab": slab, "offs": offs, "H": hidden, "ydim": ydim}


# ----------------------------- fused kernel ---------------------------------

def _make_fused_kernel(offs, Bb, N, H, ydim):
    """Bb = batch elements handled per grid step; rows = Bb*N per step."""

    def sl(ref, name):
        r0, r, c = offs[name]
        return ref[r0:r0 + r, 0:c]

    def kernel(xyz_ref, msg_ref, w_ref, exyz_ref, logits_ref):
        xyz = xyz_ref[0]                                            # (Bb*N, 3)
        msg = msg_ref[0]                                            # (Bb, ydim)

        # ----- encoder -----
        # Effective per-batch layer-1 bias: msg @ W1m + b1  (one tiny matmul,
        # independent of the per-point matmul so it hides under its latency).
        bias1 = jnp.dot(msg, sl(w_ref, "w1m"),
                        preferred_element_type=jnp.float32) + sl(w_ref, "b1")   # (Bb, H)

        # layer 1: per-point xyz @ W1x (M = Bb*N rows), single broadcast bias add.
        h1 = jnp.dot(xyz, sl(w_ref, "w1x"), preferred_element_type=jnp.float32)  # (Bb*N, H)
        h1 = h1.reshape(Bb, N, H) + bias1[:, None, :]
        h1 = jnp.maximum(h1, 0.0).reshape(Bb * N, H)

        # layer 2
        h2 = jnp.dot(h1, sl(w_ref, "w2"), preferred_element_type=jnp.float32)
        h2 = jnp.maximum(h2 + sl(w_ref, "b2"), 0.0)                 # (Bb*N, H)

        # layer 3: per-point offset, residual add onto xyz
        off = jnp.dot(h2, sl(w_ref, "w3"), preferred_element_type=jnp.float32)
        exyz = xyz + off + sl(w_ref, "b3")                          # (Bb*N, 3)
        exyz_ref[0] = exyz.astype(exyz_ref.dtype)

        # ----- decoder (fused: consumes exyz straight from registers) -----
        d1 = jnp.dot(exyz, sl(w_ref, "v1"), preferred_element_type=jnp.float32)
        d1 = jnp.maximum(d1 + sl(w_ref, "c1"), 0.0)                 # (Bb*N, H)
        d2 = jnp.dot(d1, sl(w_ref, "v2"), preferred_element_type=jnp.float32)
        d2 = jnp.maximum(d2 + sl(w_ref, "c2"), 0.0)                 # (Bb*N, H)

        # per-batch global max-pool over the point axis (H stays on lanes,
        # reduction over sublanes -> no transpose).
        g = jnp.max(d2.reshape(Bb, N, H), axis=1)                   # (Bb, H)

        logits = jnp.dot(g, sl(w_ref, "v3"), preferred_element_type=jnp.float32)
        logits_ref[0] = (logits + sl(w_ref, "c3")).astype(logits_ref.dtype)

    return kernel


# ----------------------------- wrapper ---------------------------------------

def _default_num_blocks(B):
    """1 grid step on single-TC chips (v5e/v6e); 2 on v7x so both cores work."""
    try:
        kind = jax.devices()[0].device_kind.lower()
    except Exception:
        kind = ""
    if "v7" in kind and B % 2 == 0:
        return 2
    return 1


def point_conv_ed_forward(xyz, faces, msg, idx, packed, num_blocks=None):
    """Mirrors PointConvED.forward(xyz, faces, msg, idx) -> (encoded_xyz, decoded_msg)."""
    # TODO(synk): faces / idx are accepted for signature parity but unused by
    # the reference forward path; noise_layer = [Identity()] is a no-op.
    del faces, idx
    B, N, _ = xyz.shape
    ydim = packed["ydim"]
    H = packed["H"]
    wslab = packed["wslab"]
    R, L = wslab.shape

    if num_blocks is None:
        num_blocks = _default_num_blocks(B)
    if B % num_blocks != 0:
        num_blocks = 1
    Bb = B // num_blocks
    rows = Bb * N

    # Fold the batch into the matmul row dimension; each grid step sees a
    # (rows, 3) point slab and a (Bb, ydim) message slab.
    xyz_blk = xyz.reshape(num_blocks, rows, 3)
    msg_blk = msg.astype(xyz.dtype).reshape(num_blocks, Bb, ydim)

    kernel = _make_fused_kernel(packed["offs"], Bb, N, H, ydim)
    exyz_blk, logits_blk = pl.pallas_call(
        kernel,
        out_shape=(jax.ShapeDtypeStruct((num_blocks, rows, 3), xyz.dtype),
                   jax.ShapeDtypeStruct((num_blocks, Bb, ydim), xyz.dtype)),
        grid=(num_blocks,),
        in_specs=[
            pl.BlockSpec((1, rows, 3), lambda g: (g, 0, 0)),
            pl.BlockSpec((1, Bb, ydim), lambda g: (g, 0, 0)),
            pl.BlockSpec((R, L), lambda g: (0, 0)),   # weight slab, constant index map
        ],
        out_specs=(pl.BlockSpec((1, rows, 3), lambda g: (g, 0, 0)),
                   pl.BlockSpec((1, Bb, ydim), lambda g: (g, 0, 0))),
        compiler_params=pltpu.CompilerParams(
            dimension_semantics=("parallel",)),
    )(xyz_blk, msg_blk, wslab)

    return exyz_blk.reshape(B, N, 3), logits_blk.reshape(B, ydim)


# ----------------------------- parameters -----------------------------------

def init_params(key, ydim=16, hidden=32):
    ks = jax.random.split(key, 12)
    s = 0.1
    enc = dict(
        w1x=s * jax.random.normal(ks[0], (3, hidden), jnp.float32),
        w1m=s * jax.random.normal(ks[1], (ydim, hidden), jnp.float32),
        b1=s * jax.random.normal(ks[2], (1, hidden), jnp.float32),
        w2=s * jax.random.normal(ks[3], (hidden, hidden), jnp.float32),
        b2=s * jax.random.normal(ks[4], (1, hidden), jnp.float32),
        w3=s * jax.random.normal(ks[5], (hidden, 3), jnp.float32),
        b3=s * jax.random.normal(ks[6], (1, 3), jnp.float32),
    )
    dec = dict(
        v1=s * jax.random.normal(ks[7], (3, hidden), jnp.float32),
        c1=s * jax.random.normal(ks[8], (1, hidden), jnp.float32),
        v2=s * jax.random.normal(ks[9], (hidden, hidden), jnp.float32),
        c2=s * jax.random.normal(ks[10], (1, hidden), jnp.float32),
        v3=s * jax.random.normal(ks[11], (hidden, ydim), jnp.float32),
        c3=jnp.zeros((1, ydim), jnp.float32),
    )
    return {"enc": enc, "dec": dec}


# ----------------------------- main -----------------------------------------

if __name__ == "__main__":
    B, N, YDIM, HIDDEN = 2, 64, 16, 32

    key = jax.random.PRNGKey(0)
    k_xyz, k_msg, k_faces, k_idx = jax.random.split(key, 4)
    xyz = jax.random.normal(k_xyz, (B, N, 3), dtype=jnp.float32)
    msg = jax.random.bernoulli(k_msg, 0.5, (B, YDIM)).astype(jnp.float32)
    faces = jax.random.randint(k_faces, (B, 2 * N, 3), 0, N, dtype=jnp.int32)
    idx = jax.random.randint(k_idx, (B, N), 0, N, dtype=jnp.int32)

    params = init_params(jax.random.PRNGKey(42), ydim=YDIM, hidden=HIDDEN)
    packed = pack_params(params, hidden=HIDDEN, ydim=YDIM)   # one-time weight packing

    encoded_xyz, decoded_msg = point_conv_ed_forward(xyz, faces, msg, idx, packed)
    jax.block_until_ready((encoded_xyz, decoded_msg))

    assert encoded_xyz.shape == (B, N, 3)
    assert decoded_msg.shape == (B, YDIM)
    assert bool(jnp.all(jnp.isfinite(encoded_xyz))) and bool(jnp.all(jnp.isfinite(decoded_msg)))
    print("KERNEL_OK")
</pallas_src>

<mosaic_0001>
module attributes {stable_mosaic.version = 11 : i64} {
  func.func @kernel(%arg0: i32, %arg1: memref<1x128x3xf32, #tpu.memory_space<vmem>>, %arg2: memref<1x2x16xf32, #tpu.memory_space<vmem>>, %arg3: memref<208x128xf32, #tpu.memory_space<vmem>>, %arg4: memref<1x128x3xf32, #tpu.memory_space<vmem>>, %arg5: memref<1x2x16xf32, #tpu.memory_space<vmem>>) attributes {dimension_semantics = [#tpu.dimension_semantics<parallel>], iteration_bounds = array<i64: 1>, scalar_prefetch = 0 : i64, scratch_operands = 0 : i64, tpu.core_type = #tpu.core_type<tc>, window_params = [{transform_indices = @transform_0, window_bounds = array<i64: 1, 128, 3>}, {transform_indices = @transform_1, window_bounds = array<i64: 1, 2, 16>}, {pipeline_mode = #tpu.pipeline_mode<synchronous>, transform_indices = @transform_2, window_bounds = array<i64: 208, 128>}, {transform_indices = @transform_3, window_bounds = array<i64: 1, 128, 3>}, {transform_indices = @transform_4, window_bounds = array<i64: 1, 2, 16>}]} {
    %c0 = arith.constant 0 : index
    %c0_0 = arith.constant 0 : index
    %c0_1 = arith.constant 0 : index
    %0 = vector.load %arg1[%c0, %c0_0, %c0_1] : memref<1x128x3xf32, #tpu.memory_space<vmem>>, vector<1x128x3xf32>
    %1 = vector.shape_cast %0 : vector<1x128x3xf32> to vector<128x3xf32>
    %c0_2 = arith.constant 0 : index
    %c0_3 = arith.constant 0 : index
    %c0_4 = arith.constant 0 : index
    %2 = vector.load %arg2[%c0_2, %c0_3, %c0_4] : memref<1x2x16xf32, #tpu.memory_space<vmem>>, vector<1x2x16xf32>
    %3 = vector.shape_cast %2 : vector<1x2x16xf32> to vector<2x16xf32>
    %c8 = arith.constant 8 : index
    %c0_5 = arith.constant 0 : index
    %4 = vector.load %arg3[%c8, %c0_5] : memref<208x128xf32, #tpu.memory_space<vmem>>, vector<16x32xf32>
    %cst = arith.constant dense<0.000000e+00> : vector<2x32xf32>
    %5 = tpu.matmul %3, %4, %cst {dimension_numbers = #tpu.dot_dimension_numbers<[1], [0], [0], [1], [0, 0, 1, 1], [], []>} : vector<2x16xf32>, vector<16x32xf32>, vector<2x32xf32> -> vector<2x32xf32>
    %c24 = arith.constant 24 : index
    %c0_6 = arith.constant 0 : index
    %6 = vector.load %arg3[%c24, %c0_6] : memref<208x128xf32, #tpu.memory_space<vmem>>, vector<1x32xf32>
    %7 = vector.broadcast %6 : vector<1x32xf32> to vector<2x32xf32>
    %8 = arith.addf %5, %7 : vector<2x32xf32>
    %c0_7 = arith.constant 0 : index
    %c0_8 = arith.constant 0 : index
    %9 = vector.load %arg3[%c0_7, %c0_8] : memref<208x128xf32, #tpu.memory_space<vmem>>, vector<3x32xf32>
    %cst_9 = arith.constant dense<0.000000e+00> : vector<128x32xf32>
    %10 = tpu.matmul %1, %9, %cst_9 {dimension_numbers = #tpu.dot_dimension_numbers<[1], [0], [0], [1], [0, 0, 1, 1], [], []>} : vector<128x3xf32>, vector<3x32xf32>, vector<128x32xf32> -> vector<128x32xf32>
    %11 = vector.shape_cast %10 : vector<128x32xf32> to vector<2x64x32xf32>
    %12 = vector.shape_cast %8 : vector<2x32xf32> to vector<2x1x32xf32>
    %13 = vector.broadcast %12 : vector<2x1x32xf32> to vector<2x64x32xf32>
    %14 = arith.addf %11, %13 : vector<2x64x32xf32>
    %cst_10 = arith.constant 0.000000e+00 : f32
    %15 = vector.broadcast %cst_10 : f32 to vector<2x64x32xf32>
    %16 = arith.maximumf %14, %15 : vector<2x64x32xf32>
    %17 = vector.shape_cast %16 : vector<2x64x32xf32> to vector<128x32xf32>
    %c32 = arith.constant 32 : index
    %c0_11 = arith.constant 0 : index
    %18 = vector.load %arg3[%c32, %c0_11] : memref<208x128xf32, #tpu.memory_space<vmem>>, vector<32x32xf32>
    %cst_12 = arith.constant dense<0.000000e+00> : vector<128x32xf32>
    %19 = tpu.matmul %17, %18, %cst_12 {dimension_numbers = #tpu.dot_dimension_numbers<[1], [0], [0], [1], [0, 0, 1, 1], [], []>} : vector<128x32xf32>, vector<32x32xf32>, vector<128x32xf32> -> vector<128x32xf32>
    %c64 = arith.constant 64 : index
    %c0_13 = arith.constant 0 : index
    %20 = vector.load %arg3[%c64, %c0_13] : memref<208x128xf32, #tpu.memory_space<vmem>>, vector<1x32xf32>
    %21 = vector.broadcast %20 : vector<1x32xf32> to vector<128x32xf32>
    %22 = arith.addf %19, %21 : vector<128x32xf32>
    %cst_14 = arith.constant 0.000000e+00 : f32
    %23 = vector.broadcast %cst_14 : f32 to vector<128x32xf32>
    %24 = arith.maximumf %22, %23 : vector<128x32xf32>
    %c72 = arith.constant 72 : index
    %c0_15 = arith.constant 0 : index
    %25 = vector.load %arg3[%c72, %c0_15] : memref<208x128xf32, #tpu.memory_space<vmem>>, vector<32x3xf32>
    %cst_16 = arith.constant dense<0.000000e+00> : vector<128x3xf32>
    %26 = tpu.matmul %24, %25, %cst_16 {dimension_numbers = #tpu.dot_dimension_numbers<[1], [0], [0], [1], [0, 0, 1, 1], [], []>} : vector<128x32xf32>, vector<32x3xf32>, vector<128x3xf32> -> vector<128x3xf32>
    %27 = arith.addf %1, %26 : vector<128x3xf32>
    %c104 = arith.constant 104 : index
    %c0_17 = arith.constant 0 : index
    %28 = vector.load %arg3[%c104, %c0_17] : memref<208x128xf32, #tpu.memory_space<vmem>>, vector<1x3xf32>
    %29 = vector.broadcast %28 : vector<1x3xf32> to vector<128x3xf32>
    %30 = arith.addf %27, %29 : vector<128x3xf32>
    %c0_18 = arith.constant 0 : index
    %c0_19 = arith.constant 0 : index
    %c0_20 = arith.constant 0 : index
    %31 = vector.load %arg4[%c0_18, %c0_19, %c0_20] : memref<1x128x3xf32, #tpu.memory_space<vmem>>, vector<1x128x3xf32>
    %32 = vector.shape_cast %31 : vector<1x128x3xf32> to vector<128x3xf32>
    %33 = vector.shape_cast %30 : vector<128x3xf32> to vector<1x128x3xf32>
    tpu.vector_store %arg4[%c0_18, %c0_19, %c0_20], %33 {strides = array<i32>} : memref<1x128x3xf32, #tpu.memory_space<vmem>>, vector<1x128x3xf32>,
    %c112 = arith.constant 112 : index
    %c0_21 = arith.constant 0 : index
    %34 = vector.load %arg3[%c112, %c0_21] : memref<208x128xf32, #tpu.memory_space<vmem>>, vector<3x32xf32>
    %cst_22 = arith.constant dense<0.000000e+00> : vector<128x32xf32>
    %35 = tpu.matmul %30, %34, %cst_22 {dimension_numbers = #tpu.dot_dimension_numbers<[1], [0], [0], [1], [0, 0, 1, 1], [], []>} : vector<128x3xf32>, vector<3x32xf32>, vector<128x32xf32> -> vector<128x32xf32>
    %c120 = arith.constant 120 : index
    %c0_23 = arith.constant 0 : index
    %36 = vector.load %arg3[%c120, %c0_23] : memref<208x128xf32, #tpu.memory_space<vmem>>, vector<1x32xf32>
    %37 = vector.broadcast %36 : vector<1x32xf32> to vector<128x32xf32>
    %38 = arith.addf %35, %37 : vector<128x32xf32>
    %cst_24 = arith.constant 0.000000e+00 : f32
    %39 = vector.broadcast %cst_24 : f32 to vector<128x32xf32>
    %40 = arith.maximumf %38, %39 : vector<128x32xf32>
    %c128 = arith.constant 128 : index
    %c0_25 = arith.constant 0 : index
    %41 = vector.load %arg3[%c128, %c0_25] : memref<208x128xf32, #tpu.memory_space<vmem>>, vector<32x32xf32>
    %cst_26 = arith.constant dense<0.000000e+00> : vector<128x32xf32>
    %42 = tpu.matmul %40, %41, %cst_26 {dimension_numbers = #tpu.dot_dimension_numbers<[1], [0], [0], [1], [0, 0, 1, 1], [], []>} : vector<128x32xf32>, vector<32x32xf32>, vector<128x32xf32> -> vector<128x32xf32>
    %c160 = arith.constant 160 : index
    %c0_27 = arith.constant 0 : index
    %43 = vector.load %arg3[%c160, %c0_27] : memref<208x128xf32, #tpu.memory_space<vmem>>, vector<1x32xf32>
    %44 = vector.broadcast %43 : vector<1x32xf32> to vector<128x32xf32>
    %45 = arith.addf %42, %44 : vector<128x32xf32>
    %cst_28 = arith.constant 0.000000e+00 : f32
    %46 = vector.broadcast %cst_28 : f32 to vector<128x32xf32>
    %47 = arith.maximumf %45, %46 : vector<128x32xf32>
    %48 = vector.shape_cast %47 : vector<128x32xf32> to vector<2x64x32xf32>
    %cst_29 = arith.constant dense<0xFF800000> : vector<2x32xf32>
    %49 = vector.multi_reduction <maximumf>, %48, %cst_29 [1] : vector<2x64x32xf32> to vector<2x32xf32>
    %c168 = arith.constant 168 : index
    %c0_30 = arith.constant 0 : index
    %50 = vector.load %arg3[%c168, %c0_30] : memref<208x128xf32, #tpu.memory_space<vmem>>, vector<32x16xf32>
    %cst_31 = arith.constant dense<0.000000e+00> : vector<2x16xf32>
    %51 = tpu.matmul %49, %50, %cst_31 {dimension_numbers = #tpu.dot_dimension_numbers<[1], [0], [0], [1], [0, 0, 1, 1], [], []>} : vector<2x32xf32>, vector<32x16xf32>, vector<2x16xf32> -> vector<2x16xf32>
    %c200 = arith.constant 200 : index
    %c0_32 = arith.constant 0 : index
    %52 = vector.load %arg3[%c200, %c0_32] : memref<208x128xf32, #tpu.memory_space<vmem>>, vector<1x16xf32>
    %53 = vector.broadcast %52 : vector<1x16xf32> to vector<2x16xf32>
    %54 = arith.addf %51, %53 : vector<2x16xf32>
    %c0_33 = arith.constant 0 : index
    %c0_34 = arith.constant 0 : index
    %c0_35 = arith.constant 0 : index
    %55 = vector.load %arg5[%c0_33, %c0_34, %c0_35] : memref<1x2x16xf32, #tpu.memory_space<vmem>>, vector<1x2x16xf32>
    %56 = vector.shape_cast %55 : vector<1x2x16xf32> to vector<2x16xf32>
    %57 = vector.shape_cast %54 : vector<2x16xf32> to vector<1x2x16xf32>
    tpu.vector_store %arg5[%c0_33, %c0_34, %c0_35], %57 {strides = array<i32>} : memref<1x2x16xf32, #tpu.memory_space<vmem>>, vector<1x2x16xf32>,
    return
  }
  func.func @transform_0(%arg0: i32) -> (i32, i32, i32) {
    %c0_i32 = arith.constant 0 : i32
    %c0_i32_0 = arith.constant 0 : i32
    %c0_i32_1 = arith.constant 0 : i32
    return %arg0, %c0_i32, %c0_i32_0 : i32, i32, i32
  }
  func.func @transform_1(%arg0: i32) -> (i32, i32, i32) {
    %c0_i32 = arith.constant 0 : i32
    %c0_i32_0 = arith.constant 0 : i32
    %c0_i32_1 = arith.constant 0 : i32
    return %arg0, %c0_i32, %c0_i32_0 : i32, i32, i32
  }
  func.func @transform_2(%arg0: i32) -> (i32, i32) {
    %c0_i32 = arith.constant 0 : i32
    %c0_i32_0 = arith.constant 0 : i32
    %c0_i32_1 = arith.constant 0 : i32
    return %c0_i32, %c0_i32_0 : i32, i32
  }
  func.func @transform_3(%arg0: i32) -> (i32, i32, i32) {
    %c0_i32 = arith.constant 0 : i32
    %c0_i32_0 = arith.constant 0 : i32
    %c0_i32_1 = arith.constant 0 : i32
    return %arg0, %c0_i32, %c0_i32_0 : i32, i32, i32
  }
  func.func @transform_4(%arg0: i32) -> (i32, i32, i32) {
    %c0_i32 = arith.constant 0 : i32
    %c0_i32_0 = arith.constant 0 : i32
    %c0_i32_1 = arith.constant 0 : i32
    return %arg0, %c0_i32, %c0_i32_0 : i32, i32, i32
  }
}

</mosaic_0001>

<llo_original>
// kernel: tpu_custom_call.1
$region0: #{tpu_custom_call.1}
  #allocation0 [shape = 'u32[]', space=smem, size = 0x4, offset = 0x4, fixed_abs, tag = 'smem constant byte address 0x4 - core index']
  #allocation1 [shape = 'u32[144,128]{1,0:T(1,128)}', space=vmem, size = 0x12000, scoped, tag = 'internal scratch']
  %s0 = inlined_call_operand.vmem [shape: f32[1,128,3], index: 0, kind: input, shape index: {}]
  %s1 = inlined_call_operand.vmem [shape: f32[1,2,16], index: 1, kind: input, shape index: {}]
  %s2 = inlined_call_operand.hbm [shape: f32[208,128], index: 2, kind: input, shape index: {}]
  %s3 = inlined_call_operand.vmem [shape: f32[1,128,3], index: 3, kind: output, shape index: {0}]
  %s4 = inlined_call_operand.hbm [shape: f32[1,2,16], index: 4, kind: output, shape index: {1}]
  %5 = xla_tuple %s3, %s4
  %s6 = sld [smem:[#allocation0]]
  $region34: #{tpu_custom_call.1} parent=0
    _
  %s8 = ssub.s32 1, %s6
  %s9 = scalar_select 0, %s8, %s6
  $region1: #{tpu_custom_call.1} parent=0
    #allocation2 [shape = 'u8[106496]{0}', space=vmem, size = 0x1a000, scoped, tag = 'input window, operand 2, single buffered']
    #allocation3 [shape = 's32[1]{0}', space=sflag, size = 0x4, scoped, tag = 'scoped memory for tpu_custom_call.1']
    #allocation4 [shape = 's32[1]{0}', space=sflag, size = 0x4, scoped, tag = 'scoped memory for tpu_custom_call.1']
    #allocation5 [shape = 'u8[1024]{0}', space=vmem, size = 0x400, scoped, tag = 'output window, operand 1, single buffered']
    %10 = vsyncpa [#allocation3], 0
    %11 = vsyncpa [#allocation4], 0
    // Predicated region
    $region2: #{tpu_custom_call.1} parent=1 // pred_check
      _
    $region3: #{tpu_custom_call.1} parent=1 // pred_check_branch
      %13 = sbr.rel (0) target = $region5
    $region4: #{tpu_custom_call.1} parent=1 // pred_region
      _
    $region5: #{tpu_custom_call.1} parent=1 // pred_fallthru
      _
    // Predicated region
    $region6: #{tpu_custom_call.1} parent=1 // pred_check
      _
    $region7: #{tpu_custom_call.1} parent=1 // pred_check_branch
      %15 = sbr.rel (0) target = $region9
    $region8: #{tpu_custom_call.1} parent=1 // pred_region
      _
    $region9: #{tpu_custom_call.1} parent=1 // pred_fallthru
      _
    // Predicated region
    $region10: #{tpu_custom_call.1} parent=1 // pred_check
      _
    $region11: #{tpu_custom_call.1} parent=1 // pred_check_branch
      %17 = sbr.rel (0) target = $region13
    $region12: #{tpu_custom_call.1} parent=1 // pred_region
      %s19 = ssub.s32 3328, 3328
      %20 = vsyncadd [#allocation3], %s19
      %s21 = sshll.u32 [#allocation2], 4
      %s22 = int_to_ptr.vmem [resolvable:$true] %s21
      %27 = dma.hbm_to_vmem [thread:$0]  %s2, 3328, %s22, [#allocation3], 128, 128, 8
    $region13: #{tpu_custom_call.1} parent=1 // pred_fallthru
      _
    // Predicated region
    $region14: #{tpu_custom_call.1} parent=1 // pred_check
      _
    $region15: #{tpu_custom_call.1} parent=1 // pred_check_branch
      %29 = sbr.rel (0) target = $region17
    $region16: #{tpu_custom_call.1} parent=1 // pred_region
      %30 = dma.done [#allocation3], 3328
    $region17: #{tpu_custom_call.1} parent=1 // pred_fallthru
      _
    %v31 = vld [vmem:[%s0] sm:$0xff]
    %v32 = vld [vmem:[%s0 + $0x8] sm:$0xff]
    %v33 = vld [vmem:[%s0 + $0x10] sm:$0xff]
    %v34 = vld [vmem:[%s0 + $0x18] sm:$0xff]
    %v35 = vld [vmem:[%s0 + $0x20] sm:$0xff]
    %v36 = vld [vmem:[%s0 + $0x28] sm:$0xff]
    %v37 = vld [vmem:[%s0 + $0x30] sm:$0xff]
    %v38 = vld [vmem:[%s0 + $0x38] sm:$0xff]
    %v39 = vld [vmem:[%s0 + $0x40] sm:$0xff]
    %v40 = vld [vmem:[%s0 + $0x48] sm:$0xff]
    %v41 = vld [vmem:[%s0 + $0x50] sm:$0xff]
    %v42 = vld [vmem:[%s0 + $0x58] sm:$0xff]
    %v43 = vld [vmem:[%s0 + $0x60] sm:$0xff]
    %v44 = vld [vmem:[%s0 + $0x68] sm:$0xff]
    %v45 = vld [vmem:[%s0 + $0x70] sm:$0xff]
    %v46 = vld [vmem:[%s0 + $0x78] sm:$0xff]
    %v47 = vld [vmem:[%s1] sm:$0x3]
    %v48 = vld [vmem:[#allocation2 + $0x8] sm:$0xff]
    %v49 = vld [vmem:[#allocation2 + $0x10] sm:$0xff]
    %v50 = vld [vmem:[#allocation2 + $0x18] sm:$0x1]
    %v51 = vlaneseq
    %v52 = vshrl.u32 %v51, 7
    %v53 = vsub.s32 0, %v52
    %v54 = vrot.slane %v50, %v53
    %vm55 = vcmask 130048
    %v57 = vsel %vm55, %v47, 0
    %59 = vmatprep.subr.mxu0 0.0
    %60 = vmatpush1.msra.mxu0 %v48
    %61 = vmatprep.subr.mxu0 0.0
    %62 = vmatpush1.msra.mxu0 %v49
    %63 = vmatprep.subr.mxu0 0.0
    %64 = vmatpush1.msra.mxu0 0.0
    %65 = vmatprep.subr.mxu0 0.0
    %66 = vmatpush1.msra.mxu0 0.0
    %67 = vmatprep.subr.mxu0 0.0
    %68 = vmatpush1.msra.mxu0 0.0
    %69 = vmatprep.subr.mxu0 0.0
    %70 = vmatpush1.msra.mxu0 0.0
    %71 = vmatprep.subr.mxu0 0.0
    %72 = vmatpush1.msra.mxu0 0.0
    %73 = vmatprep.subr.mxu0 0.0
    %74 = vmatpush1.msra.mxu0 0.0
    %75 = vmatprep.subr.mxu0 0.0
    %76 = vmatpush1.msra.mxu0 0.0
    %77 = vmatprep.subr.mxu0 0.0
    %78 = vmatpush1.msra.mxu0 0.0
    %79 = vmatprep.subr.mxu0 0.0
    %80 = vmatpush1.msra.mxu0 0.0
    %81 = vmatprep.subr.mxu0 0.0
    %82 = vmatpush1.msra.mxu0 0.0
    %83 = vmatprep.subr.mxu0 0.0
    %84 = vmatpush1.msra.mxu0 0.0
    %85 = vmatprep.subr.mxu0 0.0
    %86 = vmatpush1.msra.mxu0 0.0
    %87 = vmatprep.subr.mxu0 0.0
    %88 = vmatpush1.msra.mxu0 0.0
    %89 = vmatprep.subr.mxu0 0.0
    %90 = vmatpush1.msra.mxu0 0.0
    %91 = vmatprep.subr.mxu0 0.0
    %92 = vmatpush1.msra.mxu0 0.0
    %93 = vmatprep.subr.mxu0 0.0
    %94 = vmatpush1.msra.mxu0 0.0
    %95 = vmatprep.subr.mxu0 0.0
    %96 = vmatpush1.msra.mxu0 0.0
    %97 = vmatprep.subr.mxu0 0.0
    %98 = vmatpush1.msra.mxu0 0.0
    %99 = vmatprep.subr.mxu0 0.0
    %100 = vmatpush1.msra.mxu0 0.0
    %101 = vmatprep.subr.mxu0 0.0
    %102 = vmatpush1.msra.mxu0 0.0
    %103 = vmatprep.subr.mxu0 0.0
    %104 = vmatpush1.msra.mxu0 0.0
    %105 = vmatprep.subr.mxu0 0.0
    %106 = vmatpush1.msra.mxu0 0.0
    %107 = vmatprep.subr.mxu0 0.0
    %108 = vmatpush1.msra.mxu0 0.0
    %109 = vmatprep.subr.mxu0 0.0
    %110 = vmatpush1.msra.mxu0 0.0
    %111 = vmatprep.subr.mxu0 0.0
    %112 = vmatpush1.msra.mxu0 0.0
    %113 = vmatprep.subr.mxu0 0.0
    %114 = vmatpush1.msra.mxu0 0.0
    %115 = vmatprep.subr.mxu0 0.0
    %116 = vmatpush1.msra.mxu0 0.0
    %117 = vmatprep.subr.mxu0 0.0
    %118 = vmatpush1.msra.mxu0 0.0
    %119 = vmatprep.subr.mxu0 0.0
    %120 = vmatpush1.msra.mxu0 0.0
    %121 = vmatprep.subr.mxu0 0.0
    %122 = vmatpush1.msra.mxu0 0.0
    %123 = vmatprep.mubr.f32.mxu0 0.0
    %124 = vmatmul.mubr.f32.gmra.mrb[0].mxu0 %v57
    %v125 = vpop.f32.mrb[0].mxu0
    %v126 = vadd.f32 %v54, %v125
    %v127 = vpop.f32.mrb[0].mxu0
    %128 = vdwg.mxu0
    %v129 = vld [vmem:[#allocation2] sm:$0x7]
    %vm130 = vcmask 23552
    %v132 = vsel %vm130, %v31, 0
    %v135 = vsel %vm130, %v32, 0
    %v138 = vsel %vm130, %v33, 0
    %v141 = vsel %vm130, %v34, 0
    %v144 = vsel %vm130, %v35, 0
    %v147 = vsel %vm130, %v36, 0
    %v150 = vsel %vm130, %v37, 0
    %v153 = vsel %vm130, %v38, 0
    %v156 = vsel %vm130, %v39, 0
    %v159 = vsel %vm130, %v40, 0
    %v162 = vsel %vm130, %v41, 0
    %v165 = vsel %vm130, %v42, 0
    %v168 = vsel %vm130, %v43, 0
    %v171 = vsel %vm130, %v44, 0
    %v174 = vsel %vm130, %v45, 0
    %v177 = vsel %vm130, %v46, 0
    %vm179 = vcmask 1042432
    %v181 = vsel %vm179, %v129, 0
    %183 = vmatprep.subr.mxu0 0.0
    %184 = vmatpush1.msra.mxu0 %v181
    %185 = vmatprep.subr.mxu0 0.0
    %186 = vmatpush1.msra.mxu0 0.0
    %187 = vmatprep.subr.mxu0 0.0
    %188 = vmatpush1.msra.mxu0 0.0
    %189 = vmatprep.subr.mxu0 0.0
    %190 = vmatpush1.msra.mxu0 0.0
    %191 = vmatprep.subr.mxu0 0.0
    %192 = vmatpush1.msra.mxu0 0.0
    %193 = vmatprep.subr.mxu0 0.0
    %194 = vmatpush1.msra.mxu0 0.0
    %195 = vmatprep.subr.mxu0 0.0
    %196 = vmatpush1.msra.mxu0 0.0
    %197 = vmatprep.subr.mxu0 0.0
    %198 = vmatpush1.msra.mxu0 0.0
    %199 = vmatprep.subr.mxu0 0.0
    %200 = vmatpush1.msra.mxu0 0.0
    %201 = vmatprep.subr.mxu0 0.0
    %202 = vmatpush1.msra.mxu0 0.0
    %203 = vmatprep.subr.mxu0 0.0
    %204 = vmatpush1.msra.mxu0 0.0
    %205 = vmatprep.subr.mxu0 0.0
    %206 = vmatpush1.msra.mxu0 0.0
    %207 = vmatprep.subr.mxu0 0.0
    %208 = vmatpush1.msra.mxu0 0.0
    %209 = vmatprep.subr.mxu0 0.0
    %210 = vmatpush1.msra.mxu0 0.0
    %211 = vmatprep.subr.mxu0 0.0
    %212 = vmatpush1.msra.mxu0 0.0
    %213 = vmatprep.subr.mxu0 0.0
    %214 = vmatpush1.msra.mxu0 0.0
    %215 = vmatprep.subr.mxu0 0.0
    %216 = vmatpush1.msra.mxu0 0.0
    %217 = vmatprep.subr.mxu0 0.0
    %218 = vmatpush1.msra.mxu0 0.0
    %219 = vmatprep.subr.mxu0 0.0
    %220 = vmatpush1.msra.mxu0 0.0
    %221 = vmatprep.subr.mxu0 0.0
    %222 = vmatpush1.msra.mxu0 0.0
    %223 = vmatprep.subr.mxu0 0.0
    %224 = vmatpush1.msra.mxu0 0.0
    %225 = vmatprep.subr.mxu0 0.0
    %226 = vmatpush1.msra.mxu0 0.0
    %227 = vmatprep.subr.mxu0 0.0
    %228 = vmatpush1.msra.mxu0 0.0
    %229 = vmatprep.subr.mxu0 0.0
    %230 = vmatpush1.msra.mxu0 0.0
    %231 = vmatprep.subr.mxu0 0.0
    %232 = vmatpush1.msra.mxu0 0.0
    %233 = vmatprep.subr.mxu0 0.0
    %234 = vmatpush1.msra.mxu0 0.0
    %235 = vmatprep.subr.mxu0 0.0
    %236 = vmatpush1.msra.mxu0 0.0
    %237 = vmatprep.subr.mxu0 0.0
    %238 = vmatpush1.msra.mxu0 0.0
    %239 = vmatprep.subr.mxu0 0.0
    %240 = vmatpush1.msra.mxu0 0.0
    %241 = vmatprep.subr.mxu0 0.0
    %242 = vmatpush1.msra.mxu0 0.0
    %243 = vmatprep.subr.mxu0 0.0
    %244 = vmatpush1.msra.mxu0 0.0
    %245 = vmatprep.subr.mxu0 0.0
    %246 = vmatpush1.msra.mxu0 0.0
    %247 = vmatprep.mubr.f32.mxu0 0.0
    %248 = vmatmul.mubr.f32.gmra.mrb[0].mxu0 %v132
    %v249 = vpop.f32.mrb[0].mxu0
    %v250 = vadd.f32 0.0, %v249
    %v251 = vpop.f32.mrb[0].mxu0
    %252 = vmatprep.mubr.f32.mxu0 0.0
    %253 = vmatmul.mubr.f32.gmra.mrb[0].mxu0 %v135
    %v254 = vpop.f32.mrb[0].mxu0
    %v255 = vadd.f32 0.0, %v254
    %v256 = vpop.f32.mrb[0].mxu0
    %257 = vmatprep.mubr.f32.mxu0 0.0
    %258 = vmatmul.mubr.f32.gmra.mrb[0].mxu0 %v138
    %v259 = vpop.f32.mrb[0].mxu0
    %v260 = vadd.f32 0.0, %v259
    %v261 = vpop.f32.mrb[0].mxu0
    %262 = vmatprep.mubr.f32.mxu0 0.0
    %263 = vmatmul.mubr.f32.gmra.mrb[0].mxu0 %v141
    %v264 = vpop.f32.mrb[0].mxu0
    %v265 = vadd.f32 0.0, %v264
    %v266 = vpop.f32.mrb[0].mxu0
    %267 = vmatprep.mubr.f32.mxu0 0.0
    %268 = vmatmul.mubr.f32.gmra.mrb[0].mxu0 %v144
    %v269 = vpop.f32.mrb[0].mxu0
    %v270 = vadd.f32 0.0, %v269
    %v271 = vpop.f32.mrb[0].mxu0
    %272 = vmatprep.mubr.f32.mxu0 0.0
    %273 = vmatmul.mubr.f32.gmra.mrb[0].mxu0 %v147
    %v274 = vpop.f32.mrb[0].mxu0
    %v275 = vadd.f32 0.0, %v274
    %v276 = vpop.f32.mrb[0].mxu0
    %277 = vmatprep.mubr.f32.mxu0 0.0
    %278 = vmatmul.mubr.f32.gmra.mrb[0].mxu0 %v150
    %v279 = vpop.f32.mrb[0].mxu0
    %v280 = vadd.f32 0.0, %v279
    %v281 = vpop.f32.mrb[0].mxu0
    %282 = vmatprep.mubr.f32.mxu0 0.0
    %283 = vmatmul.mubr.f32.gmra.mrb[0].mxu0 %v153
    %v284 = vpop.f32.mrb[0].mxu0
    %v285 = vadd.f32 0.0, %v284
    %v286 = vpop.f32.mrb[0].mxu0
    %287 = vmatprep.mubr.f32.mxu0 0.0
    %288 = vmatmul.mubr.f32.gmra.mrb[0].mxu0 %v156
    %v289 = vpop.f32.mrb[0].mxu0
    %v290 = vadd.f32 0.0, %v289
    %v291 = vpop.f32.mrb[0].mxu0
    %292 = vmatprep.mubr.f32.mxu0 0.0
    %293 = vmatmul.mubr.f32.gmra.mrb[0].mxu0 %v159
    %v294 = vpop.f32.mrb[0].mxu0
    %v295 = vadd.f32 0.0, %v294
    %v296 = vpop.f32.mrb[0].mxu0
    %297 = vmatprep.mubr.f32.mxu0 0.0
    %298 = vmatmul.mubr.f32.gmra.mrb[0].mxu0 %v162
    %v299 = vpop.f32.mrb[0].mxu0
    %v300 = vadd.f32 0.0, %v299
    %v301 = vpop.f32.mrb[0].mxu0
    %302 = vmatprep.mubr.f32.mxu0 0.0
    %303 = vmatmul.mubr.f32.gmra.mrb[0].mxu0 %v165
    %v304 = vpop.f32.mrb[0].mxu0
    %v305 = vadd.f32 0.0, %v304
    %v306 = vpop.f32.mrb[0].mxu0
    %307 = vmatprep.mubr.f32.mxu0 0.0
    %308 = vmatmul.mubr.f32.gmra.mrb[0].mxu0 %v168
    %v309 = vpop.f32.mrb[0].mxu0
    %v310 = vadd.f32 0.0, %v309
    %v311 = vpop.f32.mrb[0].mxu0
    %312 = vmatprep.mubr.f32.mxu0 0.0
    %313 = vmatmul.mubr.f32.gmra.mrb[0].mxu0 %v171
    %v314 = vpop.f32.mrb[0].mxu0
    %v315 = vadd.f32 0.0, %v314
    %v316 = vpop.f32.mrb[0].mxu0
    %317 = vmatprep.mubr.f32.mxu0 0.0
    %318 = vmatmul.mubr.f32.gmra.mrb[0].mxu0 %v174
    %v319 = vpop.f32.mrb[0].mxu0
    %v320 = vadd.f32 0.0, %v319
    %v321 = vpop.f32.mrb[0].mxu0
    %322 = vmatprep.mubr.f32.mxu0 0.0
    %323 = vmatmul.mubr.f32.gmra.mrb[0].mxu0 %v177
    %v324 = vpop.f32.mrb[0].mxu0
    %v325 = vadd.f32 0.0, %v324
    %v326 = vpop.f32.mrb[0].mxu0
    %327 = vdwg.mxu0
    %v330 = vunpack.c.l.s4 1966171168
    %v331 = vunpack.c.0.s8 %v330
    %v332 = vlaneseq
    %v333 = vshrl.u32 %v332, 7
    %v334 = vsub.s32 %v331, %v333
    %v335 = vrot.slane %v126, %v334
    %v336 = vcombine.high %v335, %v335
    %v338 = vunpack.c.l.s4 1966171168
    %v339 = vunpack.c.0.s8 %v338
    %v340 = vlaneseq
    %v341 = vshrl.u32 %v340, 7
    %v342 = vsub.s32 %v339, %v341
    %v343 = vrot.slane %v335, %v342
    %v345 = vunpack.c.l.s4 1966171168
    %v346 = vunpack.c.0.s8 %v345
    %v347 = vlaneseq
    %v348 = vshrl.u32 %v347, 7
    %v349 = vsub.s32 %v346, %v348
    %v350 = vrot.slane %v336, %v349
    %v351 = vlaneseq
    %v352 = vshrl.u32 %v351, 7
    %v353 = vsub.s32 0, %v352
    %v354 = vrot.slane %v343, %v353
    %v355 = vlaneseq
    %v356 = vshrl.u32 %v355, 7
    %v357 = vsub.s32 0, %v356
    %v358 = vrot.slane %v350, %v357
    %v361 = vadd.f32 %v250, %v354
    %v362 = vadd.f32 %v255, %v354
    %v363 = vadd.f32 %v260, %v354
    %v364 = vadd.f32 %v265, %v354
    %v365 = vadd.f32 %v270, %v354
    %v366 = vadd.f32 %v275, %v354
    %v367 = vadd.f32 %v280, %v354
    %v368 = vadd.f32 %v285, %v354
    %v369 = vadd.f32 %v290, %v358
    %v370 = vadd.f32 %v295, %v358
    %v371 = vadd.f32 %v300, %v358
    %v372 = vadd.f32 %v305, %v358
    %v373 = vadd.f32 %v310, %v358
    %v374 = vadd.f32 %v315, %v358
    %v375 = vadd.f32 %v320, %v358
    %v376 = vadd.f32 %v325, %v358
    %v377 = vmax.f32 %v361, 0.0
    %v378 = vmax.f32 %v362, 0.0
    %v379 = vmax.f32 %v363, 0.0
    %v380 = vmax.f32 %v364, 0.0
    %v381 = vmax.f32 %v365, 0.0
    %v382 = vmax.f32 %v366, 0.0
    %v383 = vmax.f32 %v367, 0.0
    %v384 = vmax.f32 %v368, 0.0
    %v385 = vmax.f32 %v369, 0.0
    %v386 = vmax.f32 %v370, 0.0
    %v387 = vmax.f32 %v371, 0.0
    %v388 = vmax.f32 %v372, 0.0
    %v389 = vmax.f32 %v373, 0.0
    %v390 = vmax.f32 %v374, 0.0
    %v391 = vmax.f32 %v375, 0.0
    %v392 = vmax.f32 %v376, 0.0
    %v393 = vld [vmem:[#allocation2 + $0x20] sm:$0xff]
    %v394 = vld [vmem:[#allocation2 + $0x28] sm:$0xff]
    %v395 = vld [vmem:[#allocation2 + $0x30] sm:$0xff]
    %v396 = vld [vmem:[#allocation2 + $0x38] sm:$0xff]
    %v397 = vld [vmem:[#allocation2 + $0x40] sm:$0x1]
    %v398 = vlaneseq
    %v399 = vshrl.u32 %v398, 7
    %v400 = vsub.s32 0, %v399
    %v401 = vrot.slane %v397, %v400
    %vm402 = vcmask 261120
    %v404 = vsel %vm402, %v377, 0
    %v407 = vsel %vm402, %v378, 0
    %v410 = vsel %vm402, %v379, 0
    %v413 = vsel %vm402, %v380, 0
    %v416 = vsel %vm402, %v381, 0
    %v419 = vsel %vm402, %v382, 0
    %v422 = vsel %vm402, %v383, 0
    %v425 = vsel %vm402, %v384, 0
    %v428 = vsel %vm402, %v385, 0
    %v431 = vsel %vm402, %v386, 0
    %v434 = vsel %vm402, %v387, 0
    %v437 = vsel %vm402, %v388, 0
    %v440 = vsel %vm402, %v389, 0
    %v443 = vsel %vm402, %v390, 0
    %v446 = vsel %vm402, %v391, 0
    %v449 = vsel %vm402, %v392, 0
    %451 = vmatprep.subr.mxu0 0.0
    %452 = vmatpush1.msra.mxu0 %v393
    %453 = vmatprep.subr.mxu0 0.0
    %454 = vmatpush1.msra.mxu0 %v394
    %455 = vmatprep.subr.mxu0 0.0
    %456 = vmatpush1.msra.mxu0 %v395
    %457 = vmatprep.subr.mxu0 0.0
    %458 = vmatpush1.msra.mxu0 %v396
    %459 = vmatprep.subr.mxu0 0.0
    %460 = vmatpush1.msra.mxu0 0.0
    %461 = vmatprep.subr.mxu0 0.0
    %462 = vmatpush1.msra.mxu0 0.0
    %463 = vmatprep.subr.mxu0 0.0
    %464 = vmatpush1.msra.mxu0 0.0
    %465 = vmatprep.subr.mxu0 0.0
    %466 = vmatpush1.msra.mxu0 0.0
    %467 = vmatprep.subr.mxu0 0.0
    %468 = vmatpush1.msra.mxu0 0.0
    %469 = vmatprep.subr.mxu0 0.0
    %470 = vmatpush1.msra.mxu0 0.0
    %471 = vmatprep.subr.mxu0 0.0
    %472 = vmatpush1.msra.mxu0 0.0
    %473 = vmatprep.subr.mxu0 0.0
    %474 = vmatpush1.msra.mxu0 0.0
    %475 = vmatprep.subr.mxu0 0.0
    %476 = vmatpush1.msra.mxu0 0.0
    %477 = vmatprep.subr.mxu0 0.0
    %478 = vmatpush1.msra.mxu0 0.0
    %479 = vmatprep.subr.mxu0 0.0
    %480 = vmatpush1.msra.mxu0 0.0
    %481 = vmatprep.subr.mxu0 0.0
    %482 = vmatpush1.msra.mxu0 0.0
    %483 = vmatprep.subr.mxu0 0.0
    %484 = vmatpush1.msra.mxu0 0.0
    %485 = vmatprep.subr.mxu0 0.0
    %486 = vmatpush1.msra.mxu0 0.0
    %487 = vmatprep.subr.mxu0 0.0
    %488 = vmatpush1.msra.mxu0 0.0
    %489 = vmatprep.subr.mxu0 0.0
    %490 = vmatpush1.msra.mxu0 0.0
    %491 = vmatprep.subr.mxu0 0.0
    %492 = vmatpush1.msra.mxu0 0.0
    %493 = vmatprep.subr.mxu0 0.0
    %494 = vmatpush1.msra.mxu0 0.0
    %495 = vmatprep.subr.mxu0 0.0
    %496 = vmatpush1.msra.mxu0 0.0
    %497 = vmatprep.subr.mxu0 0.0
    %498 = vmatpush1.msra.mxu0 0.0
    %499 = vmatprep.subr.mxu0 0.0
    %500 = vmatpush1.msra.mxu0 0.0
    %501 = vmatprep.subr.mxu0 0.0
    %502 = vmatpush1.msra.mxu0 0.0
    %503 = vmatprep.subr.mxu0 0.0
    %504 = vmatpush1.msra.mxu0 0.0
    %505 = vmatprep.subr.mxu0 0.0
    %506 = vmatpush1.msra.mxu0 0.0
    %507 = vmatprep.subr.mxu0 0.0
    %508 = vmatpush1.msra.mxu0 0.0
    %509 = vmatprep.subr.mxu0 0.0
    %510 = vmatpush1.msra.mxu0 0.0
    %511 = vmatprep.subr.mxu0 0.0
    %512 = vmatpush1.msra.mxu0 0.0
    %513 = vmatprep.subr.mxu0 0.0
    %514 = vmatpush1.msra.mxu0 0.0
    %515 = vmatprep.mubr.f32.mxu0 0.0
    %516 = vmatmul.mubr.f32.gmra.mrb[0].mxu0 %v404
    %v517 = vpop.f32.mrb[0].mxu0
    %v518 = vadd.f32 %v401, %v517
    %v519 = vpop.f32.mrb[0].mxu0
    %520 = vmatprep.mubr.f32.mxu0 0.0
    %521 = vmatmul.mubr.f32.gmra.mrb[0].mxu0 %v407
    %v522 = vpop.f32.mrb[0].mxu0
    %v523 = vadd.f32 %v401, %v522
    %v524 = vpop.f32.mrb[0].mxu0
    %525 = vmatprep.mubr.f32.mxu0 0.0
    %526 = vmatmul.mubr.f32.gmra.mrb[0].mxu0 %v410
    %v527 = vpop.f32.mrb[0].mxu0
    %v528 = vadd.f32 %v401, %v527
    %v529 = vpop.f32.mrb[0].mxu0
    %530 = vmatprep.mubr.f32.mxu0 0.0
    %531 = vmatmul.mubr.f32.gmra.mrb[0].mxu0 %v413
    %v532 = vpop.f32.mrb[0].mxu0
    %v533 = vadd.f32 %v401, %v532
    %v534 = vpop.f32.mrb[0].mxu0
    %535 = vmatprep.mubr.f32.mxu0 0.0
    %536 = vmatmul.mubr.f32.gmra.mrb[0].mxu0 %v416
    %v537 = vpop.f32.mrb[0].mxu0
    %v538 = vadd.f32 %v401, %v537
    %v539 = vpop.f32.mrb[0].mxu0
    %540 = vmatprep.mubr.f32.mxu0 0.0
    %541 = vmatmul.mubr.f32.gmra.mrb[0].mxu0 %v419
    %v542 = vpop.f32.mrb[0].mxu0
    %v543 = vadd.f32 %v401, %v542
    %v544 = vpop.f32.mrb[0].mxu0
    %545 = vmatprep.mubr.f32.mxu0 0.0
    %546 = vmatmul.mubr.f32.gmra.mrb[0].mxu0 %v422
    %v547 = vpop.f32.mrb[0].mxu0
    %v548 = vadd.f32 %v401, %v547
    %v549 = vpop.f32.mrb[0].mxu0
    %550 = vmatprep.mubr.f32.mxu0 0.0
    %551 = vmatmul.mubr.f32.gmra.mrb[0].mxu0 %v425
    %v552 = vpop.f32.mrb[0].mxu0
    %v553 = vadd.f32 %v401, %v552
    %v554 = vpop.f32.mrb[0].mxu0
    %555 = vmatprep.mubr.f32.mxu0 0.0
    %556 = vmatmul.mubr.f32.gmra.mrb[0].mxu0 %v428
    %v557 = vpop.f32.mrb[0].mxu0
    %v558 = vadd.f32 %v401, %v557
    %v559 = vpop.f32.mrb[0].mxu0
    %560 = vmatprep.mubr.f32.mxu0 0.0
    %561 = vmatmul.mubr.f32.gmra.mrb[0].mxu0 %v431
    %v562 = vpop.f32.mrb[0].mxu0
    %v563 = vadd.f32 %v401, %v562
    %v564 = vpop.f32.mrb[0].mxu0
    %565 = vmatprep.mubr.f32.mxu0 0.0
    %566 = vmatmul.mubr.f32.gmra.mrb[0].mxu0 %v434
    %v567 = vpop.f32.mrb[0].mxu0
    %v568 = vadd.f32 %v401, %v567
    %v569 = vpop.f32.mrb[0].mxu0
    %570 = vmatprep.mubr.f32.mxu0 0.0
    %571 = vmatmul.mubr.f32.gmra.mrb[0].mxu0 %v437
    %v572 = vpop.f32.mrb[0].mxu0
    %v573 = vadd.f32 %v401, %v572
    %v574 = vpop.f32.mrb[0].mxu0
    %575 = vmatprep.mubr.f32.mxu0 0.0
    %576 = vmatmul.mubr.f32.gmra.mrb[0].mxu0 %v440
    %v577 = vpop.f32.mrb[0].mxu0
    %v578 = vadd.f32 %v401, %v577
    %v579 = vpop.f32.mrb[0].mxu0
    %580 = vmatprep.mubr.f32.mxu0 0.0
    %581 = vmatmul.mubr.f32.gmra.mrb[0].mxu0 %v443
    %v582 = vpop.f32.mrb[0].mxu0
    %v583 = vadd.f32 %v401, %v582
    %v584 = vpop.f32.mrb[0].mxu0
    %585 = vmatprep.mubr.f32.mxu0 0.0
    %586 = vmatmul.mubr.f32.gmra.mrb[0].mxu0 %v446
    %v587 = vpop.f32.mrb[0].mxu0
    %v588 = vadd.f32 %v401, %v587
    %v589 = vpop.f32.mrb[0].mxu0
    %590 = vmatprep.mubr.f32.mxu0 0.0
    %591 = vmatmul.mubr.f32.gmra.mrb[0].mxu0 %v449
    %v592 = vpop.f32.mrb[0].mxu0
    %v593 = vadd.f32 %v401, %v592
    %v594 = vpop.f32.mrb[0].mxu0
    %595 = vdwg.mxu0
    %v596 = vmax.f32 %v518, 0.0
    %v597 = vmax.f32 %v523, 0.0
    %v598 = vmax.f32 %v528, 0.0
    %v599 = vmax.f32 %v533, 0.0
    %v600 = vmax.f32 %v538, 0.0
    %v601 = vmax.f32 %v543, 0.0
    %v602 = vmax.f32 %v548, 0.0
    %v603 = vmax.f32 %v553, 0.0
    %v604 = vmax.f32 %v558, 0.0
    %v605 = vmax.f32 %v563, 0.0
    %v606 = vmax.f32 %v568, 0.0
    %v607 = vmax.f32 %v573, 0.0
    %v608 = vmax.f32 %v578, 0.0
    %v609 = vmax.f32 %v583, 0.0
    %v610 = vmax.f32 %v588, 0.0
    %v611 = vmax.f32 %v593, 0.0
    %v612 = vld [vmem:[#allocation2 + $0x48] sm:$0xff]
    %v613 = vld [vmem:[#allocation2 + $0x50] sm:$0xff]
    %v614 = vld [vmem:[#allocation2 + $0x58] sm:$0xff]
    %v615 = vld [vmem:[#allocation2 + $0x60] sm:$0xff]
    %v617 = vsel %vm402, %v596, 0
    %v620 = vsel %vm402, %v597, 0
    %v623 = vsel %vm402, %v598, 0
    %v626 = vsel %vm402, %v599, 0
    %v629 = vsel %vm402, %v600, 0
    %v632 = vsel %vm402, %v601, 0
    %v635 = vsel %vm402, %v602, 0
    %v638 = vsel %vm402, %v603, 0
    %v641 = vsel %vm402, %v604, 0
    %v644 = vsel %vm402, %v605, 0
    %v647 = vsel %vm402, %v606, 0
    %v650 = vsel %vm402, %v607, 0
    %v653 = vsel %vm402, %v608, 0
    %v656 = vsel %vm402, %v609, 0
    %v659 = vsel %vm402, %v610, 0
    %v662 = vsel %vm402, %v611, 0
    %664 = vmatprep.subr.mxu0 0.0
    %665 = vmatpush1.msra.mxu0 %v612
    %666 = vmatprep.subr.mxu0 0.0
    %667 = vmatpush1.msra.mxu0 %v613
    %668 = vmatprep.subr.mxu0 0.0
    %669 = vmatpush1.msra.mxu0 %v614
    %670 = vmatprep.subr.mxu0 0.0
    %671 = vmatpush1.msra.mxu0 %v615
    %672 = vmatprep.subr.mxu0 0.0
    %673 = vmatpush1.msra.mxu0 0.0
    %674 = vmatprep.subr.mxu0 0.0
    %675 = vmatpush1.msra.mxu0 0.0
    %676 = vmatprep.subr.mxu0 0.0
    %677 = vmatpush1.msra.mxu0 0.0
    %678 = vmatprep.subr.mxu0 0.0
    %679 = vmatpush1.msra.mxu0 0.0
    %680 = vmatprep.subr.mxu0 0.0
    %681 = vmatpush1.msra.mxu0 0.0
    %682 = vmatprep.subr.mxu0 0.0
    %683 = vmatpush1.msra.mxu0 0.0
    %684 = vmatprep.subr.mxu0 0.0
    %685 = vmatpush1.msra.mxu0 0.0
    %686 = vmatprep.subr.mxu0 0.0
    %687 = vmatpush1.msra.mxu0 0.0
    %688 = vmatprep.subr.mxu0 0.0
    %689 = vmatpush1.msra.mxu0 0.0
    %690 = vmatprep.subr.mxu0 0.0
    %691 = vmatpush1.msra.mxu0 0.0
    %692 = vmatprep.subr.mxu0 0.0
    %693 = vmatpush1.msra.mxu0 0.0
    %694 = vmatprep.subr.mxu0 0.0
    %695 = vmatpush1.msra.mxu0 0.0
    %696 = vmatprep.subr.mxu0 0.0
    %697 = vmatpush1.msra.mxu0 0.0
    %698 = vmatprep.subr.mxu0 0.0
    %699 = vmatpush1.msra.mxu0 0.0
    %700 = vmatprep.subr.mxu0 0.0
    %701 = vmatpush1.msra.mxu0 0.0
    %702 = vmatprep.subr.mxu0 0.0
    %703 = vmatpush1.msra.mxu0 0.0
    %704 = vmatprep.subr.mxu0 0.0
    %705 = vmatpush1.msra.mxu0 0.0
    %706 = vmatprep.subr.mxu0 0.0
    %707 = vmatpush1.msra.mxu0 0.0
    %708 = vmatprep.subr.mxu0 0.0
    %709 = vmatpush1.msra.mxu0 0.0
    %710 = vmatprep.subr.mxu0 0.0
    %711 = vmatpush1.msra.mxu0 0.0
    %712 = vmatprep.subr.mxu0 0.0
    %713 = vmatpush1.msra.mxu0 0.0
    %714 = vmatprep.subr.mxu0 0.0
    %715 = vmatpush1.msra.mxu0 0.0
    %716 = vmatprep.subr.mxu0 0.0
    %717 = vmatpush1.msra.mxu0 0.0
    %718 = vmatprep.subr.mxu0 0.0
    %719 = vmatpush1.msra.mxu0 0.0
    %720 = vmatprep.subr.mxu0 0.0
    %721 = vmatpush1.msra.mxu0 0.0
    %722 = vmatprep.subr.mxu0 0.0
    %723 = vmatpush1.msra.mxu0 0.0
    %724 = vmatprep.subr.mxu0 0.0
    %725 = vmatpush1.msra.mxu0 0.0
    %726 = vmatprep.subr.mxu0 0.0
    %727 = vmatpush1.msra.mxu0 0.0
    %728 = vmatprep.mubr.f32.mxu0 0.0
    %729 = vmatmul.mubr.f32.gmra.mrb[0].mxu0 %v617
    %v730 = vpop.f32.mrb[0].mxu0
    %v731 = vadd.f32 0.0, %v730
    %v732 = vpop.f32.mrb[0].mxu0
    %733 = vmatprep.mubr.f32.mxu0 0.0
    %734 = vmatmul.mubr.f32.gmra.mrb[0].mxu0 %v620
    %v735 = vpop.f32.mrb[0].mxu0
    %v736 = vadd.f32 0.0, %v735
    %v737 = vpop.f32.mrb[0].mxu0
    %738 = vmatprep.mubr.f32.mxu0 0.0
    %739 = vmatmul.mubr.f32.gmra.mrb[0].mxu0 %v623
    %v740 = vpop.f32.mrb[0].mxu0
    %v741 = vadd.f32 0.0, %v740
    %v742 = vpop.f32.mrb[0].mxu0
    %743 = vmatprep.mubr.f32.mxu0 0.0
    %744 = vmatmul.mubr.f32.gmra.mrb[0].mxu0 %v626
    %v745 = vpop.f32.mrb[0].mxu0
    %v746 = vadd.f32 0.0, %v745
    %v747 = vpop.f32.mrb[0].mxu0
    %748 = vmatprep.mubr.f32.mxu0 0.0
    %749 = vmatmul.mubr.f32.gmra.mrb[0].mxu0 %v629
    %v750 = vpop.f32.mrb[0].mxu0
    %v751 = vadd.f32 0.0, %v750
    %v752 = vpop.f32.mrb[0].mxu0
    %753 = vmatprep.mubr.f32.mxu0 0.0
    %754 = vmatmul.mubr.f32.gmra.mrb[0].mxu0 %v632
    %v755 = vpop.f32.mrb[0].mxu0
    %v756 = vadd.f32 0.0, %v755
    %v757 = vpop.f32.mrb[0].mxu0
    %758 = vmatprep.mubr.f32.mxu0 0.0
    %759 = vmatmul.mubr.f32.gmra.mrb[0].mxu0 %v635
    %v760 = vpop.f32.mrb[0].mxu0
    %v761 = vadd.f32 0.0, %v760
    %v762 = vpop.f32.mrb[0].mxu0
    %763 = vmatprep.mubr.f32.mxu0 0.0
    %764 = vmatmul.mubr.f32.gmra.mrb[0].mxu0 %v638
    %v765 = vpop.f32.mrb[0].mxu0
    %v766 = vadd.f32 0.0, %v765
    %v767 = vpop.f32.mrb[0].mxu0
    %768 = vmatprep.mubr.f32.mxu0 0.0
    %769 = vmatmul.mubr.f32.gmra.mrb[0].mxu0 %v641
    %v770 = vpop.f32.mrb[0].mxu0
    %v771 = vadd.f32 0.0, %v770
    %v772 = vpop.f32.mrb[0].mxu0
    %773 = vmatprep.mubr.f32.mxu0 0.0
    %774 = vmatmul.mubr.f32.gmra.mrb[0].mxu0 %v644
    %v775 = vpop.f32.mrb[0].mxu0
    %v776 = vadd.f32 0.0, %v775
    %v777 = vpop.f32.mrb[0].mxu0
    %778 = vmatprep.mubr.f32.mxu0 0.0
    %779 = vmatmul.mubr.f32.gmra.mrb[0].mxu0 %v647
    %v780 = vpop.f32.mrb[0].mxu0
    %v781 = vadd.f32 0.0, %v780
    %v782 = vpop.f32.mrb[0].mxu0
    %783 = vmatprep.mubr.f32.mxu0 0.0
    %784 = vmatmul.mubr.f32.gmra.mrb[0].mxu0 %v650
    %v785 = vpop.f32.mrb[0].mxu0
    %v786 = vadd.f32 0.0, %v785
    %v787 = vpop.f32.mrb[0].mxu0
    %788 = vmatprep.mubr.f32.mxu0 0.0
    %789 = vmatmul.mubr.f32.gmra.mrb[0].mxu0 %v653
    %v790 = vpop.f32.mrb[0].mxu0
    %v791 = vadd.f32 0.0, %v790
    %v792 = vpop.f32.mrb[0].mxu0
    %793 = vmatprep.mubr.f32.mxu0 0.0
    %794 = vmatmul.mubr.f32.gmra.mrb[0].mxu0 %v656
    %v795 = vpop.f32.mrb[0].mxu0
    %v796 = vadd.f32 0.0, %v795
    %v797 = vpop.f32.mrb[0].mxu0
    %798 = vmatprep.mubr.f32.mxu0 0.0
    %799 = vmatmul.mubr.f32.gmra.mrb[0].mxu0 %v659
    %v800 = vpop.f32.mrb[0].mxu0
    %v801 = vadd.f32 0.0, %v800
    %v802 = vpop.f32.mrb[0].mxu0
    %803 = vmatprep.mubr.f32.mxu0 0.0
    %804 = vmatmul.mubr.f32.gmra.mrb[0].mxu0 %v662
    %v805 = vpop.f32.mrb[0].mxu0
    %v806 = vadd.f32 0.0, %v805
    %v807 = vpop.f32.mrb[0].mxu0
    %808 = vdwg.mxu0
    %v809 = vadd.f32 %v31, %v731
    %v810 = vadd.f32 %v32, %v736
    %v811 = vadd.f32 %v33, %v741
    %v812 = vadd.f32 %v34, %v746
    %v813 = vadd.f32 %v35, %v751
    %v814 = vadd.f32 %v36, %v756
    %v815 = vadd.f32 %v37, %v761
    %v816 = vadd.f32 %v38, %v766
    %v817 = vadd.f32 %v39, %v771
    %v818 = vadd.f32 %v40, %v776
    %v819 = vadd.f32 %v41, %v781
    %v820 = vadd.f32 %v42, %v786
    %v821 = vadd.f32 %v43, %v791
    %v822 = vadd.f32 %v44, %v796
    %v823 = vadd.f32 %v45, %v801
    %v824 = vadd.f32 %v46, %v806
    %v825 = vld [vmem:[#allocation2 + $0x68] sm:$0x1]
    %v826 = vlaneseq
    %v827 = vshrl.u32 %v826, 7
    %v828 = vsub.s32 0, %v827
    %v829 = vrot.slane %v825, %v828
    %v830 = vadd.f32 %v809, %v829
    %v831 = vadd.f32 %v810, %v829
    %v832 = vadd.f32 %v811, %v829
    %v833 = vadd.f32 %v812, %v829
    %v834 = vadd.f32 %v813, %v829
    %v835 = vadd.f32 %v814, %v829
    %v836 = vadd.f32 %v815, %v829
    %v837 = vadd.f32 %v816, %v829
    %v838 = vadd.f32 %v817, %v829
    %v839 = vadd.f32 %v818, %v829
    %v840 = vadd.f32 %v819, %v829
    %v841 = vadd.f32 %v820, %v829
    %v842 = vadd.f32 %v821, %v829
    %v843 = vadd.f32 %v822, %v829
    %v844 = vadd.f32 %v823, %v829
    %v845 = vadd.f32 %v824, %v829
    %846 = vst.msk [vmem:[%s3] sm:$0xff] %vm130, %v830
    %847 = vst.msk [vmem:[%s3 + $0x8] sm:$0xff] %vm130, %v831
    %848 = vst.msk [vmem:[%s3 + $0x10] sm:$0xff] %vm130, %v832
    %849 = vst.msk [vmem:[%s3 + $0x18] sm:$0xff] %vm130, %v833
    %850 = vst.msk [vmem:[%s3 + $0x20] sm:$0xff] %vm130, %v834
    %851 = vst.msk [vmem:[%s3 + $0x28] sm:$0xff] %vm130, %v835
    %852 = vst.msk [vmem:[%s3 + $0x30] sm:$0xff] %vm130, %v836
    %853 = vst.msk [vmem:[%s3 + $0x38] sm:$0xff] %vm130, %v837
    %854 = vst.msk [vmem:[%s3 + $0x40] sm:$0xff] %vm130, %v838
    %855 = vst.msk [vmem:[%s3 + $0x48] sm:$0xff] %vm130, %v839
    %856 = vst.msk [vmem:[%s3 + $0x50] sm:$0xff] %vm130, %v840
    %857 = vst.msk [vmem:[%s3 + $0x58] sm:$0xff] %vm130, %v841
    %858 = vst.msk [vmem:[%s3 + $0x60] sm:$0xff] %vm130, %v842
    %859 = vst.msk [vmem:[%s3 + $0x68] sm:$0xff] %vm130, %v843
    %860 = vst.msk [vmem:[%s3 + $0x70] sm:$0xff] %vm130, %v844
    %861 = vst.msk [vmem:[%s3 + $0x78] sm:$0xff] %vm130, %v845
    %v862 = vld [vmem:[#allocation2 + $0x70] sm:$0x7]
    %v863 = vld [vmem:[#allocation2 + $0x78] sm:$0x1]
    %v864 = vlaneseq
    %v865 = vshrl.u32 %v864, 7
    %v866 = vsub.s32 0, %v865
    %v867 = vrot.slane %v863, %v866
    %v869 = vsel %vm130, %v830, 0
    %v872 = vsel %vm130, %v831, 0
    %v875 = vsel %vm130, %v832, 0
    %v878 = vsel %vm130, %v833, 0
    %v881 = vsel %vm130, %v834, 0
    %v884 = vsel %vm130, %v835, 0
    %v887 = vsel %vm130, %v836, 0
    %v890 = vsel %vm130, %v837, 0
    %v893 = vsel %vm130, %v838, 0
    %v896 = vsel %vm130, %v839, 0
    %v899 = vsel %vm130, %v840, 0
    %v902 = vsel %vm130, %v841, 0
    %v905 = vsel %vm130, %v842, 0
    %v908 = vsel %vm130, %v843, 0
    %v911 = vsel %vm130, %v844, 0
    %v914 = vsel %vm130, %v845, 0
    %v917 = vsel %vm179, %v862, 0
    %919 = vmatprep.subr.mxu0 0.0
    %920 = vmatpush1.msra.mxu0 %v917
    %921 = vmatprep.subr.mxu0 0.0
    %922 = vmatpush1.msra.mxu0 0.0
    %923 = vmatprep.subr.mxu0 0.0
    %924 = vmatpush1.msra.mxu0 0.0
    %925 = vmatprep.subr.mxu0 0.0
    %926 = vmatpush1.msra.mxu0 0.0
    %927 = vmatprep.subr.mxu0 0.0
    %928 = vmatpush1.msra.mxu0 0.0
    %929 = vmatprep.subr.mxu0 0.0
    %930 = vmatpush1.msra.mxu0 0.0
    %931 = vmatprep.subr.mxu0 0.0
    %932 = vmatpush1.msra.mxu0 0.0
    %933 = vmatprep.subr.mxu0 0.0
    %934 = vmatpush1.msra.mxu0 0.0
    %935 = vmatprep.subr.mxu0 0.0
    %936 = vmatpush1.msra.mxu0 0.0
    %937 = vmatprep.subr.mxu0 0.0
    %938 = vmatpush1.msra.mxu0 0.0
    %939 = vmatprep.subr.mxu0 0.0
    %940 = vmatpush1.msra.mxu0 0.0
    %941 = vmatprep.subr.mxu0 0.0
    %942 = vmatpush1.msra.mxu0 0.0
    %943 = vmatprep.subr.mxu0 0.0
    %944 = vmatpush1.msra.mxu0 0.0
    %945 = vmatprep.subr.mxu0 0.0
    %946 = vmatpush1.msra.mxu0 0.0
    %947 = vmatprep.subr.mxu0 0.0
    %948 = vmatpush1.msra.mxu0 0.0
    %949 = vmatprep.subr.mxu0 0.0
    %950 = vmatpush1.msra.mxu0 0.0
    %951 = vmatprep.subr.mxu0 0.0
    %952 = vmatpush1.msra.mxu0 0.0
    %953 = vmatprep.subr.mxu0 0.0
    %954 = vmatpush1.msra.mxu0 0.0
    %955 = vmatprep.subr.mxu0 0.0
    %956 = vmatpush1.msra.mxu0 0.0
    %957 = vmatprep.subr.mxu0 0.0
    %958 = vmatpush1.msra.mxu0 0.0
    %959 = vmatprep.subr.mxu0 0.0
    %960 = vmatpush1.msra.mxu0 0.0
    %961 = vmatprep.subr.mxu0 0.0
    %962 = vmatpush1.msra.mxu0 0.0
    %963 = vmatprep.subr.mxu0 0.0
    %964 = vmatpush1.msra.mxu0 0.0
    %965 = vmatprep.subr.mxu0 0.0
    %966 = vmatpush1.msra.mxu0 0.0
    %967 = vmatprep.subr.mxu0 0.0
    %968 = vmatpush1.msra.mxu0 0.0
    %969 = vmatprep.subr.mxu0 0.0
    %970 = vmatpush1.msra.mxu0 0.0
    %971 = vmatprep.subr.mxu0 0.0
    %972 = vmatpush1.msra.mxu0 0.0
    %973 = vmatprep.subr.mxu0 0.0
    %974 = vmatpush1.msra.mxu0 0.0
    %975 = vmatprep.subr.mxu0 0.0
    %976 = vmatpush1.msra.mxu0 0.0
    %977 = vmatprep.subr.mxu0 0.0
    %978 = vmatpush1.msra.mxu0 0.0
    %979 = vmatprep.subr.mxu0 0.0
    %980 = vmatpush1.msra.mxu0 0.0
    %981 = vmatprep.subr.mxu0 0.0
    %982 = vmatpush1.msra.mxu0 0.0
    %983 = vmatprep.mubr.f32.mxu0 0.0
    %984 = vmatmul.mubr.f32.gmra.mrb[0].mxu0 %v869
    %v985 = vpop.f32.mrb[0].mxu0
    %v986 = vadd.f32 %v867, %v985
    %v987 = vpop.f32.mrb[0].mxu0
    %988 = vmatprep.mubr.f32.mxu0 0.0
    %989 = vmatmul.mubr.f32.gmra.mrb[0].mxu0 %v872
    %v990 = vpop.f32.mrb[0].mxu0
    %v991 = vadd.f32 %v867, %v990
    %v992 = vpop.f32.mrb[0].mxu0
    %993 = vmatprep.mubr.f32.mxu0 0.0
    %994 = vmatmul.mubr.f32.gmra.mrb[0].mxu0 %v875
    %v995 = vpop.f32.mrb[0].mxu0
    %v996 = vadd.f32 %v867, %v995
    %v997 = vpop.f32.mrb[0].mxu0
    %998 = vmatprep.mubr.f32.mxu0 0.0
    %999 = vmatmul.mubr.f32.gmra.mrb[0].mxu0 %v878
    %v1000 = vpop.f32.mrb[0].mxu0
    %v1001 = vadd.f32 %v867, %v1000
    %v1002 = vpop.f32.mrb[0].mxu0
    %1003 = vmatprep.mubr.f32.mxu0 0.0
    %1004 = vmatmul.mubr.f32.gmra.mrb[0].mxu0 %v881
    %v1005 = vpop.f32.mrb[0].mxu0
    %v1006 = vadd.f32 %v867, %v1005
    %v1007 = vpop.f32.mrb[0].mxu0
    %1008 = vmatprep.mubr.f32.mxu0 0.0
    %1009 = vmatmul.mubr.f32.gmra.mrb[0].mxu0 %v884
    %v1010 = vpop.f32.mrb[0].mxu0
    %v1011 = vadd.f32 %v867, %v1010
    %v1012 = vpop.f32.mrb[0].mxu0
    %1013 = vmatprep.mubr.f32.mxu0 0.0
    %1014 = vmatmul.mubr.f32.gmra.mrb[0].mxu0 %v887
    %v1015 = vpop.f32.mrb[0].mxu0
    %v1016 = vadd.f32 %v867, %v1015
    %v1017 = vpop.f32.mrb[0].mxu0
    %1018 = vmatprep.mubr.f32.mxu0 0.0
    %1019 = vmatmul.mubr.f32.gmra.mrb[0].mxu0 %v890
    %v1020 = vpop.f32.mrb[0].mxu0
    %v1021 = vadd.f32 %v867, %v1020
    %v1022 = vpop.f32.mrb[0].mxu0
    %1023 = vmatprep.mubr.f32.mxu0 0.0
    %1024 = vmatmul.mubr.f32.gmra.mrb[0].mxu0 %v893
    %v1025 = vpop.f32.mrb[0].mxu0
    %v1026 = vadd.f32 %v867, %v1025
    %v1027 = vpop.f32.mrb[0].mxu0
    %1028 = vmatprep.mubr.f32.mxu0 0.0
    %1029 = vmatmul.mubr.f32.gmra.mrb[0].mxu0 %v896
    %v1030 = vpop.f32.mrb[0].mxu0
    %v1031 = vadd.f32 %v867, %v1030
    %v1032 = vpop.f32.mrb[0].mxu0
    %1033 = vmatprep.mubr.f32.mxu0 0.0
    %1034 = vmatmul.mubr.f32.gmra.mrb[0].mxu0 %v899
    %v1035 = vpop.f32.mrb[0].mxu0
    %v1036 = vadd.f32 %v867, %v1035
    %v1037 = vpop.f32.mrb[0].mxu0
    %1038 = vmatprep.mubr.f32.mxu0 0.0
    %1039 = vmatmul.mubr.f32.gmra.mrb[0].mxu0 %v902
    %v1040 = vpop.f32.mrb[0].mxu0
    %v1041 = vadd.f32 %v867, %v1040
    %v1042 = vpop.f32.mrb[0].mxu0
    %1043 = vmatprep.mubr.f32.mxu0 0.0
    %1044 = vmatmul.mubr.f32.gmra.mrb[0].mxu0 %v905
    %v1045 = vpop.f32.mrb[0].mxu0
    %v1046 = vadd.f32 %v867, %v1045
    %v1047 = vpop.f32.mrb[0].mxu0
    %1048 = vmatprep.mubr.f32.mxu0 0.0
    %1049 = vmatmul.mubr.f32.gmra.mrb[0].mxu0 %v908
    %v1050 = vpop.f32.mrb[0].mxu0
    %v1051 = vadd.f32 %v867, %v1050
    %v1052 = vpop.f32.mrb[0].mxu0
    %1053 = vmatprep.mubr.f32.mxu0 0.0
    %1054 = vmatmul.mubr.f32.gmra.mrb[0].mxu0 %v911
    %v1055 = vpop.f32.mrb[0].mxu0
    %v1056 = vadd.f32 %v867, %v1055
    %v1057 = vpop.f32.mrb[0].mxu0
    %1058 = vmatprep.mubr.f32.mxu0 0.0
    %1059 = vmatmul.mubr.f32.gmra.mrb[0].mxu0 %v914
    %v1060 = vpop.f32.mrb[0].mxu0
    %v1061 = vadd.f32 %v867, %v1060
    %v1062 = vpop.f32.mrb[0].mxu0
    %1063 = vdwg.mxu0
    %v1064 = vmax.f32 %v986, 0.0
    %v1065 = vmax.f32 %v991, 0.0
    %v1066 = vmax.f32 %v996, 0.0
    %v1067 = vmax.f32 %v1001, 0.0
    %v1068 = vmax.f32 %v1006, 0.0
    %v1069 = vmax.f32 %v1011, 0.0
    %v1070 = vmax.f32 %v1016, 0.0
    %v1071 = vmax.f32 %v1021, 0.0
    %v1072 = vmax.f32 %v1026, 0.0
    %v1073 = vmax.f32 %v1031, 0.0
    %v1074 = vmax.f32 %v1036, 0.0
    %v1075 = vmax.f32 %v1041, 0.0
    %v1076 = vmax.f32 %v1046, 0.0
    %v1077 = vmax.f32 %v1051, 0.0
    %v1078 = vmax.f32 %v1056, 0.0
    %v1079 = vmax.f32 %v1061, 0.0
    %v1080 = vld [vmem:[#allocation2 + $0x80] sm:$0xff]
    %v1081 = vld [vmem:[#allocation2 + $0x88] sm:$0xff]
    %v1082 = vld [vmem:[#allocation2 + $0x90] sm:$0xff]
    %v1083 = vld [vmem:[#allocation2 + $0x98] sm:$0xff]
    %v1084 = vld [vmem:[#allocation2 + $0xa0] sm:$0x1]
    %v1085 = vlaneseq
    %v1086 = vshrl.u32 %v1085, 7
    %v1087 = vsub.s32 0, %v1086
    %v1088 = vrot.slane %v1084, %v1087
    %v1090 = vsel %vm402, %v1064, 0
    %v1093 = vsel %vm402, %v1065, 0
    %v1096 = vsel %vm402, %v1066, 0
    %v1099 = vsel %vm402, %v1067, 0
    %v1102 = vsel %vm402, %v1068, 0
    %v1105 = vsel %vm402, %v1069, 0
    %v1108 = vsel %vm402, %v1070, 0
    %v1111 = vsel %vm402, %v1071, 0
    %v1114 = vsel %vm402, %v1072, 0
    %v1117 = vsel %vm402, %v1073, 0
    %v1120 = vsel %vm402, %v1074, 0
    %v1123 = vsel %vm402, %v1075, 0
    %v1126 = vsel %vm402, %v1076, 0
    %v1129 = vsel %vm402, %v1077, 0
    %v1132 = vsel %vm402, %v1078, 0
    %v1135 = vsel %vm402, %v1079, 0
    %1137 = vmatprep.subr.mxu0 0.0
    %1138 = vmatpush1.msra.mxu0 %v1080
    %1139 = vmatprep.subr.mxu0 0.0
    %1140 = vmatpush1.msra.mxu0 %v1081
    %1141 = vmatprep.subr.mxu0 0.0
    %1142 = vmatpush1.msra.mxu0 %v1082
    %1143 = vmatprep.subr.mxu0 0.0
    %1144 = vmatpush1.msra.mxu0 %v1083
    %1145 = vmatprep.subr.mxu0 0.0
    %1146 = vmatpush1.msra.mxu0 0.0
    %1147 = vmatprep.subr.mxu0 0.0
    %1148 = vmatpush1.msra.mxu0 0.0
    %1149 = vmatprep.subr.mxu0 0.0
    %1150 = vmatpush1.msra.mxu0 0.0
    %1151 = vmatprep.subr.mxu0 0.0
    %1152 = vmatpush1.msra.mxu0 0.0
    %1153 = vmatprep.subr.mxu0 0.0
    %1154 = vmatpush1.msra.mxu0 0.0
    %1155 = vmatprep.subr.mxu0 0.0
    %1156 = vmatpush1.msra.mxu0 0.0
    %1157 = vmatprep.subr.mxu0 0.0
    %1158 = vmatpush1.msra.mxu0 0.0
    %1159 = vmatprep.subr.mxu0 0.0
    %1160 = vmatpush1.msra.mxu0 0.0
    %1161 = vmatprep.subr.mxu0 0.0
    %1162 = vmatpush1.msra.mxu0 0.0
    %1163 = vmatprep.subr.mxu0 0.0
    %1164 = vmatpush1.msra.mxu0 0.0
    %1165 = vmatprep.subr.mxu0 0.0
    %1166 = vmatpush1.msra.mxu0 0.0
    %1167 = vmatprep.subr.mxu0 0.0
    %1168 = vmatpush1.msra.mxu0 0.0
    %1169 = vmatprep.subr.mxu0 0.0
    %1170 = vmatpush1.msra.mxu0 0.0
    %1171 = vmatprep.subr.mxu0 0.0
    %1172 = vmatpush1.msra.mxu0 0.0
    %1173 = vmatprep.subr.mxu0 0.0
    %1174 = vmatpush1.msra.mxu0 0.0
    %1175 = vmatprep.subr.mxu0 0.0
    %1176 = vmatpush1.msra.mxu0 0.0
    %1177 = vmatprep.subr.mxu0 0.0
    %1178 = vmatpush1.msra.mxu0 0.0
    %1179 = vmatprep.subr.mxu0 0.0
    %1180 = vmatpush1.msra.mxu0 0.0
    %1181 = vmatprep.subr.mxu0 0.0
    %1182 = vmatpush1.msra.mxu0 0.0
    %1183 = vmatprep.subr.mxu0 0.0
    %1184 = vmatpush1.msra.mxu0 0.0
    %1185 = vmatprep.subr.mxu0 0.0
    %1186 = vmatpush1.msra.mxu0 0.0
    %1187 = vmatprep.subr.mxu0 0.0
    %1188 = vmatpush1.msra.mxu0 0.0
    %1189 = vmatprep.subr.mxu0 0.0
    %1190 = vmatpush1.msra.mxu0 0.0
    %1191 = vmatprep.subr.mxu0 0.0
    %1192 = vmatpush1.msra.mxu0 0.0
    %1193 = vmatprep.subr.mxu0 0.0
    %1194 = vmatpush1.msra.mxu0 0.0
    %1195 = vmatprep.subr.mxu0 0.0
    %1196 = vmatpush1.msra.mxu0 0.0
    %1197 = vmatprep.subr.mxu0 0.0
    %1198 = vmatpush1.msra.mxu0 0.0
    %1199 = vmatprep.subr.mxu0 0.0
    %1200 = vmatpush1.msra.mxu0 0.0
    %1201 = vmatprep.mubr.f32.mxu0 0.0
    %1202 = vmatmul.mubr.f32.gmra.mrb[0].mxu0 %v1090
    %v1203 = vpop.f32.mrb[0].mxu0
    %v1204 = vadd.f32 %v1088, %v1203
    %v1205 = vpop.f32.mrb[0].mxu0
    %1206 = vmatprep.mubr.f32.mxu0 0.0
    %1207 = vmatmul.mubr.f32.gmra.mrb[0].mxu0 %v1093
    %v1208 = vpop.f32.mrb[0].mxu0
    %v1209 = vadd.f32 %v1088, %v1208
    %v1210 = vpop.f32.mrb[0].mxu0
    %1211 = vmatprep.mubr.f32.mxu0 0.0
    %1212 = vmatmul.mubr.f32.gmra.mrb[0].mxu0 %v1096
    %v1213 = vpop.f32.mrb[0].mxu0
    %v1214 = vadd.f32 %v1088, %v1213
    %v1215 = vpop.f32.mrb[0].mxu0
    %1216 = vmatprep.mubr.f32.mxu0 0.0
    %1217 = vmatmul.mubr.f32.gmra.mrb[0].mxu0 %v1099
    %v1218 = vpop.f32.mrb[0].mxu0
    %v1219 = vadd.f32 %v1088, %v1218
    %v1220 = vpop.f32.mrb[0].mxu0
    %1221 = vmatprep.mubr.f32.mxu0 0.0
    %1222 = vmatmul.mubr.f32.gmra.mrb[0].mxu0 %v1102
    %v1223 = vpop.f32.mrb[0].mxu0
    %v1224 = vadd.f32 %v1088, %v1223
    %v1225 = vpop.f32.mrb[0].mxu0
    %1226 = vmatprep.mubr.f32.mxu0 0.0
    %1227 = vmatmul.mubr.f32.gmra.mrb[0].mxu0 %v1105
    %v1228 = vpop.f32.mrb[0].mxu0
    %v1229 = vadd.f32 %v1088, %v1228
    %v1230 = vpop.f32.mrb[0].mxu0
    %1231 = vmatprep.mubr.f32.mxu0 0.0
    %1232 = vmatmul.mubr.f32.gmra.mrb[0].mxu0 %v1108
    %v1233 = vpop.f32.mrb[0].mxu0
    %v1234 = vadd.f32 %v1088, %v1233
    %v1235 = vpop.f32.mrb[0].mxu0
    %1236 = vmatprep.mubr.f32.mxu0 0.0
    %1237 = vmatmul.mubr.f32.gmra.mrb[0].mxu0 %v1111
    %v1238 = vpop.f32.mrb[0].mxu0
    %v1239 = vadd.f32 %v1088, %v1238
    %v1240 = vpop.f32.mrb[0].mxu0
    %1241 = vmatprep.mubr.f32.mxu0 0.0
    %1242 = vmatmul.mubr.f32.gmra.mrb[0].mxu0 %v1114
    %v1243 = vpop.f32.mrb[0].mxu0
    %v1244 = vadd.f32 %v1088, %v1243
    %v1245 = vpop.f32.mrb[0].mxu0
    %1246 = vmatprep.mubr.f32.mxu0 0.0
    %1247 = vmatmul.mubr.f32.gmra.mrb[0].mxu0 %v1117
    %v1248 = vpop.f32.mrb[0].mxu0
    %v1249 = vadd.f32 %v1088, %v1248
    %v1250 = vpop.f32.mrb[0].mxu0
    %1251 = vmatprep.mubr.f32.mxu0 0.0
    %1252 = vmatmul.mubr.f32.gmra.mrb[0].mxu0 %v1120
    %v1253 = vpop.f32.mrb[0].mxu0
    %v1254 = vadd.f32 %v1088, %v1253
    %v1255 = vpop.f32.mrb[0].mxu0
    %1256 = vmatprep.mubr.f32.mxu0 0.0
    %1257 = vmatmul.mubr.f32.gmra.mrb[0].mxu0 %v1123
    %v1258 = vpop.f32.mrb[0].mxu0
    %v1259 = vadd.f32 %v1088, %v1258
    %v1260 = vpop.f32.mrb[0].mxu0
    %1261 = vmatprep.mubr.f32.mxu0 0.0
    %1262 = vmatmul.mubr.f32.gmra.mrb[0].mxu0 %v1126
    %v1263 = vpop.f32.mrb[0].mxu0
    %v1264 = vadd.f32 %v1088, %v1263
    %v1265 = vpop.f32.mrb[0].mxu0
    %1266 = vmatprep.mubr.f32.mxu0 0.0
    %1267 = vmatmul.mubr.f32.gmra.mrb[0].mxu0 %v1129
    %v1268 = vpop.f32.mrb[0].mxu0
    %v1269 = vadd.f32 %v1088, %v1268
    %v1270 = vpop.f32.mrb[0].mxu0
    %1271 = vmatprep.mubr.f32.mxu0 0.0
    %1272 = vmatmul.mubr.f32.gmra.mrb[0].mxu0 %v1132
    %v1273 = vpop.f32.mrb[0].mxu0
    %v1274 = vadd.f32 %v1088, %v1273
    %v1275 = vpop.f32.mrb[0].mxu0
    %1276 = vmatprep.mubr.f32.mxu0 0.0
    %1277 = vmatmul.mubr.f32.gmra.mrb[0].mxu0 %v1135
    %v1278 = vpop.f32.mrb[0].mxu0
    %v1279 = vadd.f32 %v1088, %v1278
    %v1280 = vpop.f32.mrb[0].mxu0
    %1281 = vdwg.mxu0
    %v1282 = vmax.f32 %v1204, 0.0
    %v1283 = vmax.f32 %v1209, 0.0
    %v1284 = vmax.f32 %v1214, 0.0
    %v1285 = vmax.f32 %v1219, 0.0
    %v1286 = vmax.f32 %v1224, 0.0
    %v1287 = vmax.f32 %v1229, 0.0
    %v1288 = vmax.f32 %v1234, 0.0
    %v1289 = vmax.f32 %v1239, 0.0
    %v1290 = vmax.f32 %v1244, 0.0
    %v1291 = vmax.f32 %v1249, 0.0
    %v1292 = vmax.f32 %v1254, 0.0
    %v1293 = vmax.f32 %v1259, 0.0
    %v1294 = vmax.f32 %v1264, 0.0
    %v1295 = vmax.f32 %v1269, 0.0
    %v1296 = vmax.f32 %v1274, 0.0
    %v1297 = vmax.f32 %v1279, 0.0
    %v1298 = vsel %vm402, %v1282, -inf
    %v1299 = vsel %vm402, %v1283, -inf
    %v1300 = vsel %vm402, %v1284, -inf
    %v1301 = vmax.f32 %v1298, %v1300
    %v1302 = vsel %vm402, %v1285, -inf
    %v1303 = vmax.f32 %v1299, %v1302
    %v1304 = vsel %vm402, %v1286, -inf
    %v1305 = vmax.f32 %v1301, %v1304
    %v1306 = vsel %vm402, %v1287, -inf
    %v1307 = vmax.f32 %v1303, %v1306
    %v1308 = vsel %vm402, %v1288, -inf
    %v1309 = vmax.f32 %v1305, %v1308
    %v1310 = vsel %vm402, %v1289, -inf
    %v1311 = vmax.f32 %v1307, %v1310
    %v1312 = vmax.f32 %v1309, %v1311
    %v1313 = vrot.slane %v1312, 4
    %v1314 = vmax.f32 %v1312, %v1313
    %v1315 = vrot.slane %v1314, 2
    %v1316 = vmax.f32 %v1314, %v1315
    %v1317 = vrot.slane %v1316, 1
    %v1318 = vmax.f32 %v1316, %v1317
    %v1319 = vsel %vm402, %v1290, -inf
    %v1320 = vsel %vm402, %v1291, -inf
    %v1321 = vsel %vm402, %v1292, -inf
    %v1322 = vmax.f32 %v1319, %v1321
    %v1323 = vsel %vm402, %v1293, -inf
    %v1324 = vmax.f32 %v1320, %v1323
    %v1325 = vsel %vm402, %v1294, -inf
    %v1326 = vmax.f32 %v1322, %v1325
    %v1327 = vsel %vm402, %v1295, -inf
    %v1328 = vmax.f32 %v1324, %v1327
    %v1329 = vsel %vm402, %v1296, -inf
    %v1330 = vmax.f32 %v1326, %v1329
    %v1331 = vsel %vm402, %v1297, -inf
    %v1332 = vmax.f32 %v1328, %v1331
    %v1333 = vmax.f32 %v1330, %v1332
    %v1334 = vrot.slane %v1333, 4
    %v1335 = vmax.f32 %v1333, %v1334
    %v1336 = vrot.slane %v1335, 2
    %v1337 = vmax.f32 %v1335, %v1336
    %v1338 = vrot.slane %v1337, 1
    %v1339 = vmax.f32 %v1337, %v1338
    %v1340 = vld [vmem:[#allocation2 + $0xa8] sm:$0xff]
    %v1341 = vld [vmem:[#allocation2 + $0xb0] sm:$0xff]
    %v1342 = vld [vmem:[#allocation2 + $0xb8] sm:$0xff]
    %v1343 = vld [vmem:[#allocation2 + $0xc0] sm:$0xff]
    %v1344 = vld [vmem:[#allocation2 + $0xc8] sm:$0x1]
    %v1345 = vlaneseq
    %v1346 = vshrl.u32 %v1345, 7
    %v1347 = vsub.s32 0, %v1346
    %v1348 = vrot.slane %v1344, %v1347
    %vm1351 = vcmask 1041409
    %v1352 = vsel %vm1351, %v1339, %v1318
    %v1353 = vsel %vm402, %v1352, 0
    %1355 = vmatprep.subr.mxu0 0.0
    %1356 = vmatpush1.msra.mxu0 %v1340
    %1357 = vmatprep.subr.mxu0 0.0
    %1358 = vmatpush1.msra.mxu0 %v1341
    %1359 = vmatprep.subr.mxu0 0.0
    %1360 = vmatpush1.msra.mxu0 %v1342
    %1361 = vmatprep.subr.mxu0 0.0
    %1362 = vmatpush1.msra.mxu0 %v1343
    %1363 = vmatprep.subr.mxu0 0.0
    %1364 = vmatpush1.msra.mxu0 0.0
    %1365 = vmatprep.subr.mxu0 0.0
    %1366 = vmatpush1.msra.mxu0 0.0
    %1367 = vmatprep.subr.mxu0 0.0
    %1368 = vmatpush1.msra.mxu0 0.0
    %1369 = vmatprep.subr.mxu0 0.0
    %1370 = vmatpush1.msra.mxu0 0.0
    %1371 = vmatprep.subr.mxu0 0.0
    %1372 = vmatpush1.msra.mxu0 0.0
    %1373 = vmatprep.subr.mxu0 0.0
    %1374 = vmatpush1.msra.mxu0 0.0
    %1375 = vmatprep.subr.mxu0 0.0
    %1376 = vmatpush1.msra.mxu0 0.0
    %1377 = vmatprep.subr.mxu0 0.0
    %1378 = vmatpush1.msra.mxu0 0.0
    %1379 = vmatprep.subr.mxu0 0.0
    %1380 = vmatpush1.msra.mxu0 0.0
    %1381 = vmatprep.subr.mxu0 0.0
    %1382 = vmatpush1.msra.mxu0 0.0
    %1383 = vmatprep.subr.mxu0 0.0
    %1384 = vmatpush1.msra.mxu0 0.0
    %1385 = vmatprep.subr.mxu0 0.0
    %1386 = vmatpush1.msra.mxu0 0.0
    %1387 = vmatprep.subr.mxu0 0.0
    %1388 = vmatpush1.msra.mxu0 0.0
    %1389 = vmatprep.subr.mxu0 0.0
    %1390 = vmatpush1.msra.mxu0 0.0
    %1391 = vmatprep.subr.mxu0 0.0
    %1392 = vmatpush1.msra.mxu0 0.0
    %1393 = vmatprep.subr.mxu0 0.0
    %1394 = vmatpush1.msra.mxu0 0.0
    %1395 = vmatprep.subr.mxu0 0.0
    %1396 = vmatpush1.msra.mxu0 0.0
    %1397 = vmatprep.subr.mxu0 0.0
    %1398 = vmatpush1.msra.mxu0 0.0
    %1399 = vmatprep.subr.mxu0 0.0
    %1400 = vmatpush1.msra.mxu0 0.0
    %1401 = vmatprep.subr.mxu0 0.0
    %1402 = vmatpush1.msra.mxu0 0.0
    %1403 = vmatprep.subr.mxu0 0.0
    %1404 = vmatpush1.msra.mxu0 0.0
    %1405 = vmatprep.subr.mxu0 0.0
    %1406 = vmatpush1.msra.mxu0 0.0
    %1407 = vmatprep.subr.mxu0 0.0
    %1408 = vmatpush1.msra.mxu0 0.0
    %1409 = vmatprep.subr.mxu0 0.0
    %1410 = vmatpush1.msra.mxu0 0.0
    %1411 = vmatprep.subr.mxu0 0.0
    %1412 = vmatpush1.msra.mxu0 0.0
    %1413 = vmatprep.subr.mxu0 0.0
    %1414 = vmatpush1.msra.mxu0 0.0
    %1415 = vmatprep.subr.mxu0 0.0
    %1416 = vmatpush1.msra.mxu0 0.0
    %1417 = vmatprep.subr.mxu0 0.0
    %1418 = vmatpush1.msra.mxu0 0.0
    %1419 = vmatprep.mubr.f32.mxu0 0.0
    %1420 = vmatmul.mubr.f32.gmra.mrb[0].mxu0 %v1353
    %v1421 = vpop.f32.mrb[0].mxu0
    %v1422 = vadd.f32 %v1348, %v1421
    %v1423 = vpop.f32.mrb[0].mxu0
    %1424 = vdwg.mxu0
    %vm1425 = vcmask 123904
    %1426 = vst.msk [vmem:[#allocation5] sm:$0x3] %vm1425, %v1422
    // Predicated region
    $region18: #{tpu_custom_call.1} parent=1 // pred_check
      _
    $region19: #{tpu_custom_call.1} parent=1 // pred_check_branch
      %1428 = sbr.rel (0) target = $region21
    $region20: #{tpu_custom_call.1} parent=1 // pred_region
      _
    $region21: #{tpu_custom_call.1} parent=1 // pred_fallthru
      _
    // Predicated region
    $region22: #{tpu_custom_call.1} parent=1 // pred_check
      _
    $region23: #{tpu_custom_call.1} parent=1 // pred_check_branch
      %1430 = sbr.rel (0) target = $region25
    $region24: #{tpu_custom_call.1} parent=1 // pred_region
      %s1432 = ssub.s32 32, 32
      %1433 = vsyncadd [#allocation4], %s1432
      %s1435 = sshll.u32 [#allocation5], 4
      %s1436 = int_to_ptr.vmem [resolvable:$true] %s1435
      %1438 = dma.vmem_to_hbm [thread:$0]  %s1436, 32, %s4, [#allocation4]
    $region25: #{tpu_custom_call.1} parent=1 // pred_fallthru
      _
    // Predicated region
    $region26: #{tpu_custom_call.1} parent=1 // pred_check
      _
    $region27: #{tpu_custom_call.1} parent=1 // pred_check_branch
      %1440 = sbr.rel (0) target = $region29
    $region28: #{tpu_custom_call.1} parent=1 // pred_region
      _
    $region29: #{tpu_custom_call.1} parent=1 // pred_fallthru
      _
    // Predicated region
    $region30: #{tpu_custom_call.1} parent=1 // pred_check
      _
    $region31: #{tpu_custom_call.1} parent=1 // pred_check_branch
      %1442 = sbr.rel (0) target = $region33
    $region32: #{tpu_custom_call.1} parent=1 // pred_region
      %1443 = dma.done [#allocation4], 32
    $region33: #{tpu_custom_call.1} parent=1 // pred_fallthru
      _
    %1444 = vsyncpa [#allocation3], 1
    %1445 = vsyncpa [#allocation4], 1

</llo_original>
